<compile_context>
chip_gen: v7x
topology: tpu7x:2x2x1
jax: 0.10.0
libtpu: 0.0.40
codegen_flags: <defaults>
</compile_context>

<pallas_src>
import functools

import jax
import jax.numpy as jnp
import numpy as np
from jax.experimental import pallas as pl
from jax.experimental.pallas import tpu as pltpu

# ---------------- model configuration (small, consistent with the module) ---
B = 2          # batch
S = 16         # sequence length
H = 32         # hid_dim
NH = 4         # n_heads
HD = H // NH   # head_dim
PF = 64        # pf_dim
EPS = 1e-5     # torch LayerNorm default eps
SCALE = float(np.sqrt(HD))        # torch.sqrt(LongTensor([head_dim]))
INV_SCALE = 1.0 / SCALE


def _layer_norm(v, gamma, beta):
    mean = jnp.mean(v, axis=-1, keepdims=True)
    var = jnp.mean((v - mean) ** 2, axis=-1, keepdims=True)
    return (v - mean) * jax.lax.rsqrt(var + EPS) * gamma + beta


# ---------------- Pallas kernel ----------------------------------------------
def encoder_layer_kernel(nb, src_ref, mask_ref, wqkv_ref, wo_ref, w1_ref,
                         w2_ref, vecs_ref, out_ref, ctx_ref):
    # src_ref : (nb*S, H)      rows for `nb` batch elements
    # mask_ref: (nb, 1, S)     key mask (1.0 keep, 0.0 masked)
    # vecs_ref: (8, 128)       packed 1-D params (see pack_params)
    # ctx_ref : (nb*S, H)      VMEM scratch for the attention context
    x = src_ref[...]                                    # (nb*S, H)
    vecs = vecs_ref[...]                                # (8, 128)
    bqkv = vecs[0, :3 * H]
    bo = vecs[1, :H]
    g1 = vecs[2, :H]
    be1 = vecs[3, :H]
    b1 = vecs[4, :PF]
    b2 = vecs[5, :H]
    g2 = vecs[6, :H]
    be2 = vecs[7, :H]

    # ---- fused QKV projection (one matmul for all batch rows) --------------
    qkv = jnp.dot(x, wqkv_ref[...], preferred_element_type=jnp.float32) + bqkv

    mval = mask_ref[...]                                # (nb, 1, S)

    # ---- multi-head self-attention core (statically unrolled, tiny shapes) -
    for b in range(nb):
        r0, r1 = b * S, (b + 1) * S
        # mask bias computed ONCE per batch element (hoisted out of head loop)
        bias = jnp.where(mval[b, 0, :] == 0.0, -1e10, 0.0)      # (S,)
        for h in range(NH):
            qh = qkv[r0:r1, h * HD:(h + 1) * HD]                 # (S, HD)
            kh = qkv[r0:r1, H + h * HD:H + (h + 1) * HD]         # (S, HD)
            vh = qkv[r0:r1, 2 * H + h * HD:2 * H + (h + 1) * HD]  # (S, HD)
            # q @ k^T without an explicit transpose (contract last dims)
            energy = jax.lax.dot_general(
                qh, kh, (((1,), (1,)), ((), ())),
                preferred_element_type=jnp.float32) * INV_SCALE   # (S, S)
            energy = energy + bias[None, :]
            energy = energy - jnp.max(energy, axis=-1, keepdims=True)
            p = jnp.exp(energy)
            denom = jnp.sum(p, axis=-1, keepdims=True)
            attn = p * pl.reciprocal(denom, approx=True)          # EUP slot
            ctx_ref[r0:r1, h * HD:(h + 1) * HD] = jnp.dot(
                attn, vh, preferred_element_type=jnp.float32)

    ctx = ctx_ref[...]                                  # (nb*S, H)

    # ---- output projection + residual + LayerNorm 1 (dropout == identity) --
    attn_out = jnp.dot(ctx, wo_ref[...], preferred_element_type=jnp.float32) + bo
    y = _layer_norm(x + attn_out, g1, be1)

    # ---- positionwise feed-forward + residual + LayerNorm 2 ----------------
    hidden = jnp.maximum(
        jnp.dot(y, w1_ref[...], preferred_element_type=jnp.float32) + b1, 0.0)
    ff = jnp.dot(hidden, w2_ref[...], preferred_element_type=jnp.float32) + b2
    out_ref[...] = _layer_norm(y + ff, g2, be2).astype(out_ref.dtype)


# ---------------- wrapper -----------------------------------------------------
def encoder_layer(src, src_mask, packed_params, nb):
    """src: (B,S,H) f32, src_mask: (B,1,S) f32 -> (B,S,H) f32.

    nb = batch elements per grid step (B on v5e/v6e -> single grid step;
    1 on v7x -> grid=(B,) sharded across the 2 TensorCores).
    """
    assert B % nb == 0
    wqkv, wo, w1, w2, vecs = packed_params
    nbs = nb * S
    src2 = src.reshape(B * S, H)                         # lane layout unchanged

    full2 = lambda shape: pl.BlockSpec(shape, lambda i: (0, 0))
    in_specs = [
        pl.BlockSpec((nbs, H), lambda i: (i, 0)),        # src rows
        pl.BlockSpec((nb, 1, S), lambda i: (i, 0, 0)),   # mask
        full2((H, 3 * H)),                               # fused Wqkv
        full2((H, H)),                                   # Wo
        full2((H, PF)),                                  # W1
        full2((PF, H)),                                  # W2
        full2((8, 128)),                                 # packed 1-D params
    ]

    out = pl.pallas_call(
        functools.partial(encoder_layer_kernel, nb),
        out_shape=jax.ShapeDtypeStruct((B * S, H), jnp.float32),
        grid_spec=pltpu.PrefetchScalarGridSpec(
            num_scalar_prefetch=0,
            grid=(B // nb,),
            in_specs=in_specs,
            out_specs=pl.BlockSpec((nbs, H), lambda i: (i, 0)),
            scratch_shapes=[pltpu.VMEM((nbs, H), jnp.float32)],
        ),
        compiler_params=pltpu.CompilerParams(
            dimension_semantics=("parallel",)),
    )(src2, src_mask, wqkv, wo, w1, w2, vecs)
    return out.reshape(B, S, H)


# ---------------- parameter construction / packing ---------------------------
def make_params(key):
    """Raw parameters mirroring the PyTorch module (W stored as (in, out))."""
    ks = jax.random.split(key, 16)
    f = lambda k, shape: jax.random.normal(k, shape, jnp.float32) * 0.02
    wq, bq = f(ks[0], (H, H)), f(ks[1], (H,))
    wk, bk = f(ks[2], (H, H)), f(ks[3], (H,))
    wv, bv = f(ks[4], (H, H)), f(ks[5], (H,))
    wo, bo = f(ks[6], (H, H)), f(ks[7], (H,))
    g1 = 1.0 + f(ks[8], (H,))
    be1 = f(ks[9], (H,))
    w1, b1 = f(ks[10], (H, PF)), f(ks[11], (PF,))
    w2, b2 = f(ks[12], (PF, H)), f(ks[13], (H,))
    g2 = 1.0 + f(ks[14], (H,))
    be2 = f(ks[15], (H,))
    return (wq, bq, wk, bk, wv, bv, wo, bo, g1, be1,
            w1, b1, w2, b2, g2, be2)


def pack_params(raw):
    """Fuse Wq|Wk|Wv and pack all 1-D params into one (8,128) table."""
    (wq, bq, wk, bk, wv, bv, wo, bo, g1, be1, w1, b1, w2, b2, g2, be2) = raw
    wqkv = jnp.concatenate([wq, wk, wv], axis=1)         # (H, 3H)
    bqkv = jnp.concatenate([bq, bk, bv], axis=0)         # (3H,)
    vecs = jnp.zeros((8, 128), jnp.float32)
    vecs = vecs.at[0, :3 * H].set(bqkv)
    vecs = vecs.at[1, :H].set(bo)
    vecs = vecs.at[2, :H].set(g1)
    vecs = vecs.at[3, :H].set(be1)
    vecs = vecs.at[4, :PF].set(b1)
    vecs = vecs.at[5, :H].set(b2)
    vecs = vecs.at[6, :H].set(g2)
    vecs = vecs.at[7, :H].set(be2)
    return (wqkv, wo, w1, w2, vecs)


# ---------------- pure-JAX reference (mirrors the PyTorch forward) -----------
def encoder_layer_ref(src, src_mask, raw):
    (wq, bq, wk, bk, wv, bv, wo, bo, g1, be1, w1, b1, w2, b2, g2, be2) = raw
    x = src
    q = x @ wq + bq
    k = x @ wk + bk
    v = x @ wv + bv
    qh = q.reshape(B, S, NH, HD).transpose(0, 2, 1, 3)
    kh = k.reshape(B, S, NH, HD).transpose(0, 2, 1, 3)
    vh = v.reshape(B, S, NH, HD).transpose(0, 2, 1, 3)
    energy = jnp.einsum("bhqd,bhkd->bhqk", qh, kh) / SCALE
    mask = src_mask[:, None, :, :]                       # (B,1,1,S)
    energy = jnp.where(mask == 0.0, -1e10, energy)
    attn = jax.nn.softmax(energy, axis=-1)
    ctx = jnp.einsum("bhqk,bhkd->bhqd", attn, vh)
    ctx = ctx.transpose(0, 2, 1, 3).reshape(B, S, H)
    attn_out = ctx @ wo + bo
    y = _layer_norm(x + attn_out, g1, be1)
    ff = jnp.maximum(y @ w1 + b1, 0.0) @ w2 + b2
    return _layer_norm(y + ff, g2, be2)


if __name__ == "__main__":
    key = jax.random.PRNGKey(0)
    k_src, k_par = jax.random.split(key)
    src = jax.random.normal(k_src, (B, S, H), jnp.float32)
    # mask out the last 3 key positions of batch element 1
    src_mask = jnp.ones((B, 1, S), jnp.float32)
    src_mask = src_mask.at[1, 0, -3:].set(0.0)

    raw_params = make_params(k_par)
    packed = pack_params(raw_params)

    # v7x has 2 TensorCores per chip -> keep one batch element per grid step;
    # v5e/v6e are single-TC -> collapse the batch into a single grid step.
    kind = jax.devices()[0].device_kind.lower()
    nb = 1 if ("v7" in kind or "7x" in kind) else B

    out = jax.block_until_ready(encoder_layer(src, src_mask, packed, nb=nb))

    ref = encoder_layer_ref(src, src_mask, raw_params)
    # tolerance slightly relaxed vs 1e-4 for the EUP approx reciprocal in softmax
    np.testing.assert_allclose(np.asarray(out), np.asarray(ref),
                               rtol=5e-4, atol=5e-4)
    print("KERNEL_OK")
</pallas_src>

<mosaic_0001>
module attributes {stable_mosaic.version = 11 : i64} {
  func.func @encoder_layer_kernel(%arg0: i32, %arg1: memref<32x32xf32, #tpu.memory_space<vmem>>, %arg2: memref<2x1x16xf32, #tpu.memory_space<vmem>>, %arg3: memref<32x96xf32, #tpu.memory_space<vmem>>, %arg4: memref<32x32xf32, #tpu.memory_space<vmem>>, %arg5: memref<32x64xf32, #tpu.memory_space<vmem>>, %arg6: memref<64x32xf32, #tpu.memory_space<vmem>>, %arg7: memref<8x128xf32, #tpu.memory_space<vmem>>, %arg8: memref<32x32xf32, #tpu.memory_space<vmem>>, %arg9: memref<32x32xf32, #tpu.memory_space<vmem>>) attributes {dimension_semantics = [#tpu.dimension_semantics<parallel>], iteration_bounds = array<i64: 1>, scalar_prefetch = 0 : i64, scratch_operands = 1 : i64, tpu.core_type = #tpu.core_type<tc>, window_params = [{transform_indices = @transform_0, window_bounds = array<i64: 32, 32>}, {transform_indices = @transform_1, window_bounds = array<i64: 2, 1, 16>}, {pipeline_mode = #tpu.pipeline_mode<synchronous>, transform_indices = @transform_2, window_bounds = array<i64: 32, 96>}, {pipeline_mode = #tpu.pipeline_mode<synchronous>, transform_indices = @transform_3, window_bounds = array<i64: 32, 32>}, {pipeline_mode = #tpu.pipeline_mode<synchronous>, transform_indices = @transform_4, window_bounds = array<i64: 32, 64>}, {pipeline_mode = #tpu.pipeline_mode<synchronous>, transform_indices = @transform_5, window_bounds = array<i64: 64, 32>}, {pipeline_mode = #tpu.pipeline_mode<synchronous>, transform_indices = @transform_6, window_bounds = array<i64: 8, 128>}, {transform_indices = @transform_7, window_bounds = array<i64: 32, 32>}]} {
    %c0 = arith.constant 0 : index
    %c0_0 = arith.constant 0 : index
    %0 = vector.load %arg1[%c0, %c0_0] : memref<32x32xf32, #tpu.memory_space<vmem>>, vector<32x32xf32>
    %c0_1 = arith.constant 0 : index
    %c0_2 = arith.constant 0 : index
    %1 = vector.load %arg7[%c0_1, %c0_2] : memref<8x128xf32, #tpu.memory_space<vmem>>, vector<8x128xf32>
    %2 = vector.extract_strided_slice %1 {offsets = [0, 0], sizes = [1, 96], strides = [1, 1]} : vector<8x128xf32> to vector<1x96xf32>
    %3 = vector.shape_cast %2 : vector<1x96xf32> to vector<96xf32>
    %4 = vector.extract_strided_slice %1 {offsets = [1, 0], sizes = [1, 32], strides = [1, 1]} : vector<8x128xf32> to vector<1x32xf32>
    %5 = vector.shape_cast %4 : vector<1x32xf32> to vector<32xf32>
    %6 = vector.extract_strided_slice %1 {offsets = [2, 0], sizes = [1, 32], strides = [1, 1]} : vector<8x128xf32> to vector<1x32xf32>
    %7 = vector.shape_cast %6 : vector<1x32xf32> to vector<32xf32>
    %8 = vector.extract_strided_slice %1 {offsets = [3, 0], sizes = [1, 32], strides = [1, 1]} : vector<8x128xf32> to vector<1x32xf32>
    %9 = vector.shape_cast %8 : vector<1x32xf32> to vector<32xf32>
    %10 = vector.extract_strided_slice %1 {offsets = [4, 0], sizes = [1, 64], strides = [1, 1]} : vector<8x128xf32> to vector<1x64xf32>
    %11 = vector.shape_cast %10 : vector<1x64xf32> to vector<64xf32>
    %12 = vector.extract_strided_slice %1 {offsets = [5, 0], sizes = [1, 32], strides = [1, 1]} : vector<8x128xf32> to vector<1x32xf32>
    %13 = vector.shape_cast %12 : vector<1x32xf32> to vector<32xf32>
    %14 = vector.extract_strided_slice %1 {offsets = [6, 0], sizes = [1, 32], strides = [1, 1]} : vector<8x128xf32> to vector<1x32xf32>
    %15 = vector.shape_cast %14 : vector<1x32xf32> to vector<32xf32>
    %16 = vector.extract_strided_slice %1 {offsets = [7, 0], sizes = [1, 32], strides = [1, 1]} : vector<8x128xf32> to vector<1x32xf32>
    %17 = vector.shape_cast %16 : vector<1x32xf32> to vector<32xf32>
    %c0_3 = arith.constant 0 : index
    %c0_4 = arith.constant 0 : index
    %18 = vector.load %arg3[%c0_3, %c0_4] : memref<32x96xf32, #tpu.memory_space<vmem>>, vector<32x96xf32>
    %cst = arith.constant dense<0.000000e+00> : vector<32x96xf32>
    %19 = tpu.matmul %0, %18, %cst {dimension_numbers = #tpu.dot_dimension_numbers<[1], [0], [0], [1], [0, 0, 1, 1], [], []>} : vector<32x32xf32>, vector<32x96xf32>, vector<32x96xf32> -> vector<32x96xf32>
    %20 = vector.shape_cast %3 : vector<96xf32> to vector<1x96xf32>
    %21 = vector.broadcast %20 : vector<1x96xf32> to vector<32x96xf32>
    %22 = arith.addf %19, %21 : vector<32x96xf32>
    %c0_5 = arith.constant 0 : index
    %c0_6 = arith.constant 0 : index
    %c0_7 = arith.constant 0 : index
    %23 = vector.load %arg2[%c0_5, %c0_6, %c0_7] : memref<2x1x16xf32, #tpu.memory_space<vmem>>, vector<2x1x16xf32>
    %24 = vector.extract_strided_slice %23 {offsets = [0, 0, 0], sizes = [1, 1, 16], strides = [1, 1, 1]} : vector<2x1x16xf32> to vector<1x1x16xf32>
    %25 = vector.shape_cast %24 : vector<1x1x16xf32> to vector<16xf32>
    %cst_8 = arith.constant 0.000000e+00 : f32
    %26 = vector.broadcast %cst_8 : f32 to vector<16xf32>
    %27 = arith.cmpf oeq, %25, %26 : vector<16xf32>
    %cst_9 = arith.constant -1.000000e+10 : f32
    %cst_10 = arith.constant 0.000000e+00 : f32
    %28 = vector.broadcast %cst_9 : f32 to vector<16xf32>
    %29 = vector.broadcast %cst_10 : f32 to vector<16xf32>
    %30 = arith.select %27, %28, %29 : vector<16xi1>, vector<16xf32>
    %31 = vector.extract_strided_slice %22 {offsets = [0, 0], sizes = [16, 8], strides = [1, 1]} : vector<32x96xf32> to vector<16x8xf32>
    %32 = vector.extract_strided_slice %22 {offsets = [0, 32], sizes = [16, 8], strides = [1, 1]} : vector<32x96xf32> to vector<16x8xf32>
    %33 = vector.extract_strided_slice %22 {offsets = [0, 64], sizes = [16, 8], strides = [1, 1]} : vector<32x96xf32> to vector<16x8xf32>
    %cst_11 = arith.constant dense<0.000000e+00> : vector<16x16xf32>
    %34 = tpu.matmul %31, %32, %cst_11 {dimension_numbers = #tpu.dot_dimension_numbers<[1], [1], [0], [0], [0, 0, 1, 0], [], []>} : vector<16x8xf32>, vector<16x8xf32>, vector<16x16xf32> -> vector<16x16xf32>
    %cst_12 = arith.constant 0.353553385 : f32
    %35 = vector.broadcast %cst_12 : f32 to vector<16x16xf32>
    %36 = arith.mulf %34, %35 : vector<16x16xf32>
    %37 = vector.shape_cast %30 : vector<16xf32> to vector<1x16xf32>
    %38 = vector.broadcast %37 : vector<1x16xf32> to vector<16x16xf32>
    %39 = arith.addf %36, %38 : vector<16x16xf32>
    %cst_13 = arith.constant dense<0xFF800000> : vector<16xf32>
    %40 = vector.multi_reduction <maximumf>, %39, %cst_13 [1] : vector<16x16xf32> to vector<16xf32>
    %41 = vector.shape_cast %40 : vector<16xf32> to vector<16x1xf32>
    %42 = vector.broadcast %41 : vector<16x1xf32> to vector<16x16xf32>
    %43 = arith.subf %39, %42 : vector<16x16xf32>
    %44 = math.exp %43 : vector<16x16xf32>
    %cst_14 = arith.constant dense<0.000000e+00> : vector<16xf32>
    %45 = vector.multi_reduction <add>, %44, %cst_14 [1] : vector<16x16xf32> to vector<16xf32>
    %46 = vector.shape_cast %45 : vector<16xf32> to vector<16x1xf32>
    %47 = tpu.reciprocal %46 {approx = true} : vector<16x1xf32> -> vector<16x1xf32>
    %48 = vector.broadcast %47 : vector<16x1xf32> to vector<16x16xf32>
    %49 = arith.mulf %44, %48 : vector<16x16xf32>
    %cst_15 = arith.constant dense<0.000000e+00> : vector<16x8xf32>
    %50 = tpu.matmul %49, %33, %cst_15 {dimension_numbers = #tpu.dot_dimension_numbers<[1], [0], [0], [1], [0, 0, 1, 1], [], []>} : vector<16x16xf32>, vector<16x8xf32>, vector<16x8xf32> -> vector<16x8xf32>
    %c0_16 = arith.constant 0 : index
    %c0_17 = arith.constant 0 : index
    %51 = vector.load %arg9[%c0_16, %c0_17] : memref<32x32xf32, #tpu.memory_space<vmem>>, vector<16x8xf32>
    tpu.vector_store %arg9[%c0_16, %c0_17], %50 {strides = array<i32>} : memref<32x32xf32, #tpu.memory_space<vmem>>, vector<16x8xf32>,
    %52 = vector.extract_strided_slice %22 {offsets = [0, 8], sizes = [16, 8], strides = [1, 1]} : vector<32x96xf32> to vector<16x8xf32>
    %53 = vector.extract_strided_slice %22 {offsets = [0, 40], sizes = [16, 8], strides = [1, 1]} : vector<32x96xf32> to vector<16x8xf32>
    %54 = vector.extract_strided_slice %22 {offsets = [0, 72], sizes = [16, 8], strides = [1, 1]} : vector<32x96xf32> to vector<16x8xf32>
    %cst_18 = arith.constant dense<0.000000e+00> : vector<16x16xf32>
    %55 = tpu.matmul %52, %53, %cst_18 {dimension_numbers = #tpu.dot_dimension_numbers<[1], [1], [0], [0], [0, 0, 1, 0], [], []>} : vector<16x8xf32>, vector<16x8xf32>, vector<16x16xf32> -> vector<16x16xf32>
    %cst_19 = arith.constant 0.353553385 : f32
    %56 = vector.broadcast %cst_19 : f32 to vector<16x16xf32>
    %57 = arith.mulf %55, %56 : vector<16x16xf32>
    %58 = vector.shape_cast %30 : vector<16xf32> to vector<1x16xf32>
    %59 = vector.broadcast %58 : vector<1x16xf32> to vector<16x16xf32>
    %60 = arith.addf %57, %59 : vector<16x16xf32>
    %cst_20 = arith.constant dense<0xFF800000> : vector<16xf32>
    %61 = vector.multi_reduction <maximumf>, %60, %cst_20 [1] : vector<16x16xf32> to vector<16xf32>
    %62 = vector.shape_cast %61 : vector<16xf32> to vector<16x1xf32>
    %63 = vector.broadcast %62 : vector<16x1xf32> to vector<16x16xf32>
    %64 = arith.subf %60, %63 : vector<16x16xf32>
    %65 = math.exp %64 : vector<16x16xf32>
    %cst_21 = arith.constant dense<0.000000e+00> : vector<16xf32>
    %66 = vector.multi_reduction <add>, %65, %cst_21 [1] : vector<16x16xf32> to vector<16xf32>
    %67 = vector.shape_cast %66 : vector<16xf32> to vector<16x1xf32>
    %68 = tpu.reciprocal %67 {approx = true} : vector<16x1xf32> -> vector<16x1xf32>
    %69 = vector.broadcast %68 : vector<16x1xf32> to vector<16x16xf32>
    %70 = arith.mulf %65, %69 : vector<16x16xf32>
    %cst_22 = arith.constant dense<0.000000e+00> : vector<16x8xf32>
    %71 = tpu.matmul %70, %54, %cst_22 {dimension_numbers = #tpu.dot_dimension_numbers<[1], [0], [0], [1], [0, 0, 1, 1], [], []>} : vector<16x16xf32>, vector<16x8xf32>, vector<16x8xf32> -> vector<16x8xf32>
    %c0_23 = arith.constant 0 : index
    %c8 = arith.constant 8 : index
    %72 = vector.load %arg9[%c0_23, %c8] : memref<32x32xf32, #tpu.memory_space<vmem>>, vector<16x8xf32>
    tpu.vector_store %arg9[%c0_23, %c8], %71 {strides = array<i32>} : memref<32x32xf32, #tpu.memory_space<vmem>>, vector<16x8xf32>,
    %73 = vector.extract_strided_slice %22 {offsets = [0, 16], sizes = [16, 8], strides = [1, 1]} : vector<32x96xf32> to vector<16x8xf32>
    %74 = vector.extract_strided_slice %22 {offsets = [0, 48], sizes = [16, 8], strides = [1, 1]} : vector<32x96xf32> to vector<16x8xf32>
    %75 = vector.extract_strided_slice %22 {offsets = [0, 80], sizes = [16, 8], strides = [1, 1]} : vector<32x96xf32> to vector<16x8xf32>
    %cst_24 = arith.constant dense<0.000000e+00> : vector<16x16xf32>
    %76 = tpu.matmul %73, %74, %cst_24 {dimension_numbers = #tpu.dot_dimension_numbers<[1], [1], [0], [0], [0, 0, 1, 0], [], []>} : vector<16x8xf32>, vector<16x8xf32>, vector<16x16xf32> -> vector<16x16xf32>
    %cst_25 = arith.constant 0.353553385 : f32
    %77 = vector.broadcast %cst_25 : f32 to vector<16x16xf32>
    %78 = arith.mulf %76, %77 : vector<16x16xf32>
    %79 = vector.shape_cast %30 : vector<16xf32> to vector<1x16xf32>
    %80 = vector.broadcast %79 : vector<1x16xf32> to vector<16x16xf32>
    %81 = arith.addf %78, %80 : vector<16x16xf32>
    %cst_26 = arith.constant dense<0xFF800000> : vector<16xf32>
    %82 = vector.multi_reduction <maximumf>, %81, %cst_26 [1] : vector<16x16xf32> to vector<16xf32>
    %83 = vector.shape_cast %82 : vector<16xf32> to vector<16x1xf32>
    %84 = vector.broadcast %83 : vector<16x1xf32> to vector<16x16xf32>
    %85 = arith.subf %81, %84 : vector<16x16xf32>
    %86 = math.exp %85 : vector<16x16xf32>
    %cst_27 = arith.constant dense<0.000000e+00> : vector<16xf32>
    %87 = vector.multi_reduction <add>, %86, %cst_27 [1] : vector<16x16xf32> to vector<16xf32>
    %88 = vector.shape_cast %87 : vector<16xf32> to vector<16x1xf32>
    %89 = tpu.reciprocal %88 {approx = true} : vector<16x1xf32> -> vector<16x1xf32>
    %90 = vector.broadcast %89 : vector<16x1xf32> to vector<16x16xf32>
    %91 = arith.mulf %86, %90 : vector<16x16xf32>
    %cst_28 = arith.constant dense<0.000000e+00> : vector<16x8xf32>
    %92 = tpu.matmul %91, %75, %cst_28 {dimension_numbers = #tpu.dot_dimension_numbers<[1], [0], [0], [1], [0, 0, 1, 1], [], []>} : vector<16x16xf32>, vector<16x8xf32>, vector<16x8xf32> -> vector<16x8xf32>
    %c0_29 = arith.constant 0 : index
    %c16 = arith.constant 16 : index
    %93 = vector.load %arg9[%c0_29, %c16] : memref<32x32xf32, #tpu.memory_space<vmem>>, vector<16x8xf32>
    tpu.vector_store %arg9[%c0_29, %c16], %92 {strides = array<i32>} : memref<32x32xf32, #tpu.memory_space<vmem>>, vector<16x8xf32>,
    %94 = vector.extract_strided_slice %22 {offsets = [0, 24], sizes = [16, 8], strides = [1, 1]} : vector<32x96xf32> to vector<16x8xf32>
    %95 = vector.extract_strided_slice %22 {offsets = [0, 56], sizes = [16, 8], strides = [1, 1]} : vector<32x96xf32> to vector<16x8xf32>
    %96 = vector.extract_strided_slice %22 {offsets = [0, 88], sizes = [16, 8], strides = [1, 1]} : vector<32x96xf32> to vector<16x8xf32>
    %cst_30 = arith.constant dense<0.000000e+00> : vector<16x16xf32>
    %97 = tpu.matmul %94, %95, %cst_30 {dimension_numbers = #tpu.dot_dimension_numbers<[1], [1], [0], [0], [0, 0, 1, 0], [], []>} : vector<16x8xf32>, vector<16x8xf32>, vector<16x16xf32> -> vector<16x16xf32>
    %cst_31 = arith.constant 0.353553385 : f32
    %98 = vector.broadcast %cst_31 : f32 to vector<16x16xf32>
    %99 = arith.mulf %97, %98 : vector<16x16xf32>
    %100 = vector.shape_cast %30 : vector<16xf32> to vector<1x16xf32>
    %101 = vector.broadcast %100 : vector<1x16xf32> to vector<16x16xf32>
    %102 = arith.addf %99, %101 : vector<16x16xf32>
    %cst_32 = arith.constant dense<0xFF800000> : vector<16xf32>
    %103 = vector.multi_reduction <maximumf>, %102, %cst_32 [1] : vector<16x16xf32> to vector<16xf32>
    %104 = vector.shape_cast %103 : vector<16xf32> to vector<16x1xf32>
    %105 = vector.broadcast %104 : vector<16x1xf32> to vector<16x16xf32>
    %106 = arith.subf %102, %105 : vector<16x16xf32>
    %107 = math.exp %106 : vector<16x16xf32>
    %cst_33 = arith.constant dense<0.000000e+00> : vector<16xf32>
    %108 = vector.multi_reduction <add>, %107, %cst_33 [1] : vector<16x16xf32> to vector<16xf32>
    %109 = vector.shape_cast %108 : vector<16xf32> to vector<16x1xf32>
    %110 = tpu.reciprocal %109 {approx = true} : vector<16x1xf32> -> vector<16x1xf32>
    %111 = vector.broadcast %110 : vector<16x1xf32> to vector<16x16xf32>
    %112 = arith.mulf %107, %111 : vector<16x16xf32>
    %cst_34 = arith.constant dense<0.000000e+00> : vector<16x8xf32>
    %113 = tpu.matmul %112, %96, %cst_34 {dimension_numbers = #tpu.dot_dimension_numbers<[1], [0], [0], [1], [0, 0, 1, 1], [], []>} : vector<16x16xf32>, vector<16x8xf32>, vector<16x8xf32> -> vector<16x8xf32>
    %c0_35 = arith.constant 0 : index
    %c24 = arith.constant 24 : index
    %114 = vector.load %arg9[%c0_35, %c24] : memref<32x32xf32, #tpu.memory_space<vmem>>, vector<16x8xf32>
    tpu.vector_store %arg9[%c0_35, %c24], %113 {strides = array<i32>} : memref<32x32xf32, #tpu.memory_space<vmem>>, vector<16x8xf32>,
    %115 = vector.extract_strided_slice %23 {offsets = [1, 0, 0], sizes = [1, 1, 16], strides = [1, 1, 1]} : vector<2x1x16xf32> to vector<1x1x16xf32>
    %116 = vector.shape_cast %115 : vector<1x1x16xf32> to vector<16xf32>
    %cst_36 = arith.constant 0.000000e+00 : f32
    %117 = vector.broadcast %cst_36 : f32 to vector<16xf32>
    %118 = arith.cmpf oeq, %116, %117 : vector<16xf32>
    %cst_37 = arith.constant -1.000000e+10 : f32
    %cst_38 = arith.constant 0.000000e+00 : f32
    %119 = vector.broadcast %cst_37 : f32 to vector<16xf32>
    %120 = vector.broadcast %cst_38 : f32 to vector<16xf32>
    %121 = arith.select %118, %119, %120 : vector<16xi1>, vector<16xf32>
    %122 = vector.extract_strided_slice %22 {offsets = [16, 0], sizes = [16, 8], strides = [1, 1]} : vector<32x96xf32> to vector<16x8xf32>
    %123 = vector.extract_strided_slice %22 {offsets = [16, 32], sizes = [16, 8], strides = [1, 1]} : vector<32x96xf32> to vector<16x8xf32>
    %124 = vector.extract_strided_slice %22 {offsets = [16, 64], sizes = [16, 8], strides = [1, 1]} : vector<32x96xf32> to vector<16x8xf32>
    %cst_39 = arith.constant dense<0.000000e+00> : vector<16x16xf32>
    %125 = tpu.matmul %122, %123, %cst_39 {dimension_numbers = #tpu.dot_dimension_numbers<[1], [1], [0], [0], [0, 0, 1, 0], [], []>} : vector<16x8xf32>, vector<16x8xf32>, vector<16x16xf32> -> vector<16x16xf32>
    %cst_40 = arith.constant 0.353553385 : f32
    %126 = vector.broadcast %cst_40 : f32 to vector<16x16xf32>
    %127 = arith.mulf %125, %126 : vector<16x16xf32>
    %128 = vector.shape_cast %121 : vector<16xf32> to vector<1x16xf32>
    %129 = vector.broadcast %128 : vector<1x16xf32> to vector<16x16xf32>
    %130 = arith.addf %127, %129 : vector<16x16xf32>
    %cst_41 = arith.constant dense<0xFF800000> : vector<16xf32>
    %131 = vector.multi_reduction <maximumf>, %130, %cst_41 [1] : vector<16x16xf32> to vector<16xf32>
    %132 = vector.shape_cast %131 : vector<16xf32> to vector<16x1xf32>
    %133 = vector.broadcast %132 : vector<16x1xf32> to vector<16x16xf32>
    %134 = arith.subf %130, %133 : vector<16x16xf32>
    %135 = math.exp %134 : vector<16x16xf32>
    %cst_42 = arith.constant dense<0.000000e+00> : vector<16xf32>
    %136 = vector.multi_reduction <add>, %135, %cst_42 [1] : vector<16x16xf32> to vector<16xf32>
    %137 = vector.shape_cast %136 : vector<16xf32> to vector<16x1xf32>
    %138 = tpu.reciprocal %137 {approx = true} : vector<16x1xf32> -> vector<16x1xf32>
    %139 = vector.broadcast %138 : vector<16x1xf32> to vector<16x16xf32>
    %140 = arith.mulf %135, %139 : vector<16x16xf32>
    %cst_43 = arith.constant dense<0.000000e+00> : vector<16x8xf32>
    %141 = tpu.matmul %140, %124, %cst_43 {dimension_numbers = #tpu.dot_dimension_numbers<[1], [0], [0], [1], [0, 0, 1, 1], [], []>} : vector<16x16xf32>, vector<16x8xf32>, vector<16x8xf32> -> vector<16x8xf32>
    %c16_44 = arith.constant 16 : index
    %c0_45 = arith.constant 0 : index
    %142 = vector.load %arg9[%c16_44, %c0_45] : memref<32x32xf32, #tpu.memory_space<vmem>>, vector<16x8xf32>
    tpu.vector_store %arg9[%c16_44, %c0_45], %141 {strides = array<i32>} : memref<32x32xf32, #tpu.memory_space<vmem>>, vector<16x8xf32>,
    %143 = vector.extract_strided_slice %22 {offsets = [16, 8], sizes = [16, 8], strides = [1, 1]} : vector<32x96xf32> to vector<16x8xf32>
    %144 = vector.extract_strided_slice %22 {offsets = [16, 40], sizes = [16, 8], strides = [1, 1]} : vector<32x96xf32> to vector<16x8xf32>
    %145 = vector.extract_strided_slice %22 {offsets = [16, 72], sizes = [16, 8], strides = [1, 1]} : vector<32x96xf32> to vector<16x8xf32>
    %cst_46 = arith.constant dense<0.000000e+00> : vector<16x16xf32>
    %146 = tpu.matmul %143, %144, %cst_46 {dimension_numbers = #tpu.dot_dimension_numbers<[1], [1], [0], [0], [0, 0, 1, 0], [], []>} : vector<16x8xf32>, vector<16x8xf32>, vector<16x16xf32> -> vector<16x16xf32>
    %cst_47 = arith.constant 0.353553385 : f32
    %147 = vector.broadcast %cst_47 : f32 to vector<16x16xf32>
    %148 = arith.mulf %146, %147 : vector<16x16xf32>
    %149 = vector.shape_cast %121 : vector<16xf32> to vector<1x16xf32>
    %150 = vector.broadcast %149 : vector<1x16xf32> to vector<16x16xf32>
    %151 = arith.addf %148, %150 : vector<16x16xf32>
    %cst_48 = arith.constant dense<0xFF800000> : vector<16xf32>
    %152 = vector.multi_reduction <maximumf>, %151, %cst_48 [1] : vector<16x16xf32> to vector<16xf32>
    %153 = vector.shape_cast %152 : vector<16xf32> to vector<16x1xf32>
    %154 = vector.broadcast %153 : vector<16x1xf32> to vector<16x16xf32>
    %155 = arith.subf %151, %154 : vector<16x16xf32>
    %156 = math.exp %155 : vector<16x16xf32>
    %cst_49 = arith.constant dense<0.000000e+00> : vector<16xf32>
    %157 = vector.multi_reduction <add>, %156, %cst_49 [1] : vector<16x16xf32> to vector<16xf32>
    %158 = vector.shape_cast %157 : vector<16xf32> to vector<16x1xf32>
    %159 = tpu.reciprocal %158 {approx = true} : vector<16x1xf32> -> vector<16x1xf32>
    %160 = vector.broadcast %159 : vector<16x1xf32> to vector<16x16xf32>
    %161 = arith.mulf %156, %160 : vector<16x16xf32>
    %cst_50 = arith.constant dense<0.000000e+00> : vector<16x8xf32>
    %162 = tpu.matmul %161, %145, %cst_50 {dimension_numbers = #tpu.dot_dimension_numbers<[1], [0], [0], [1], [0, 0, 1, 1], [], []>} : vector<16x16xf32>, vector<16x8xf32>, vector<16x8xf32> -> vector<16x8xf32>
    %c16_51 = arith.constant 16 : index
    %c8_52 = arith.constant 8 : index
    %163 = vector.load %arg9[%c16_51, %c8_52] : memref<32x32xf32, #tpu.memory_space<vmem>>, vector<16x8xf32>
    tpu.vector_store %arg9[%c16_51, %c8_52], %162 {strides = array<i32>} : memref<32x32xf32, #tpu.memory_space<vmem>>, vector<16x8xf32>,
    %164 = vector.extract_strided_slice %22 {offsets = [16, 16], sizes = [16, 8], strides = [1, 1]} : vector<32x96xf32> to vector<16x8xf32>
    %165 = vector.extract_strided_slice %22 {offsets = [16, 48], sizes = [16, 8], strides = [1, 1]} : vector<32x96xf32> to vector<16x8xf32>
    %166 = vector.extract_strided_slice %22 {offsets = [16, 80], sizes = [16, 8], strides = [1, 1]} : vector<32x96xf32> to vector<16x8xf32>
    %cst_53 = arith.constant dense<0.000000e+00> : vector<16x16xf32>
    %167 = tpu.matmul %164, %165, %cst_53 {dimension_numbers = #tpu.dot_dimension_numbers<[1], [1], [0], [0], [0, 0, 1, 0], [], []>} : vector<16x8xf32>, vector<16x8xf32>, vector<16x16xf32> -> vector<16x16xf32>
    %cst_54 = arith.constant 0.353553385 : f32
    %168 = vector.broadcast %cst_54 : f32 to vector<16x16xf32>
    %169 = arith.mulf %167, %168 : vector<16x16xf32>
    %170 = vector.shape_cast %121 : vector<16xf32> to vector<1x16xf32>
    %171 = vector.broadcast %170 : vector<1x16xf32> to vector<16x16xf32>
    %172 = arith.addf %169, %171 : vector<16x16xf32>
    %cst_55 = arith.constant dense<0xFF800000> : vector<16xf32>
    %173 = vector.multi_reduction <maximumf>, %172, %cst_55 [1] : vector<16x16xf32> to vector<16xf32>
    %174 = vector.shape_cast %173 : vector<16xf32> to vector<16x1xf32>
    %175 = vector.broadcast %174 : vector<16x1xf32> to vector<16x16xf32>
    %176 = arith.subf %172, %175 : vector<16x16xf32>
    %177 = math.exp %176 : vector<16x16xf32>
    %cst_56 = arith.constant dense<0.000000e+00> : vector<16xf32>
    %178 = vector.multi_reduction <add>, %177, %cst_56 [1] : vector<16x16xf32> to vector<16xf32>
    %179 = vector.shape_cast %178 : vector<16xf32> to vector<16x1xf32>
    %180 = tpu.reciprocal %179 {approx = true} : vector<16x1xf32> -> vector<16x1xf32>
    %181 = vector.broadcast %180 : vector<16x1xf32> to vector<16x16xf32>
    %182 = arith.mulf %177, %181 : vector<16x16xf32>
    %cst_57 = arith.constant dense<0.000000e+00> : vector<16x8xf32>
    %183 = tpu.matmul %182, %166, %cst_57 {dimension_numbers = #tpu.dot_dimension_numbers<[1], [0], [0], [1], [0, 0, 1, 1], [], []>} : vector<16x16xf32>, vector<16x8xf32>, vector<16x8xf32> -> vector<16x8xf32>
    %c16_58 = arith.constant 16 : index
    %c16_59 = arith.constant 16 : index
    %184 = vector.load %arg9[%c16_58, %c16_59] : memref<32x32xf32, #tpu.memory_space<vmem>>, vector<16x8xf32>
    tpu.vector_store %arg9[%c16_58, %c16_59], %183 {strides = array<i32>} : memref<32x32xf32, #tpu.memory_space<vmem>>, vector<16x8xf32>,
    %185 = vector.extract_strided_slice %22 {offsets = [16, 24], sizes = [16, 8], strides = [1, 1]} : vector<32x96xf32> to vector<16x8xf32>
    %186 = vector.extract_strided_slice %22 {offsets = [16, 56], sizes = [16, 8], strides = [1, 1]} : vector<32x96xf32> to vector<16x8xf32>
    %187 = vector.extract_strided_slice %22 {offsets = [16, 88], sizes = [16, 8], strides = [1, 1]} : vector<32x96xf32> to vector<16x8xf32>
    %cst_60 = arith.constant dense<0.000000e+00> : vector<16x16xf32>
    %188 = tpu.matmul %185, %186, %cst_60 {dimension_numbers = #tpu.dot_dimension_numbers<[1], [1], [0], [0], [0, 0, 1, 0], [], []>} : vector<16x8xf32>, vector<16x8xf32>, vector<16x16xf32> -> vector<16x16xf32>
    %cst_61 = arith.constant 0.353553385 : f32
    %189 = vector.broadcast %cst_61 : f32 to vector<16x16xf32>
    %190 = arith.mulf %188, %189 : vector<16x16xf32>
    %191 = vector.shape_cast %121 : vector<16xf32> to vector<1x16xf32>
    %192 = vector.broadcast %191 : vector<1x16xf32> to vector<16x16xf32>
    %193 = arith.addf %190, %192 : vector<16x16xf32>
    %cst_62 = arith.constant dense<0xFF800000> : vector<16xf32>
    %194 = vector.multi_reduction <maximumf>, %193, %cst_62 [1] : vector<16x16xf32> to vector<16xf32>
    %195 = vector.shape_cast %194 : vector<16xf32> to vector<16x1xf32>
    %196 = vector.broadcast %195 : vector<16x1xf32> to vector<16x16xf32>
    %197 = arith.subf %193, %196 : vector<16x16xf32>
    %198 = math.exp %197 : vector<16x16xf32>
    %cst_63 = arith.constant dense<0.000000e+00> : vector<16xf32>
    %199 = vector.multi_reduction <add>, %198, %cst_63 [1] : vector<16x16xf32> to vector<16xf32>
    %200 = vector.shape_cast %199 : vector<16xf32> to vector<16x1xf32>
    %201 = tpu.reciprocal %200 {approx = true} : vector<16x1xf32> -> vector<16x1xf32>
    %202 = vector.broadcast %201 : vector<16x1xf32> to vector<16x16xf32>
    %203 = arith.mulf %198, %202 : vector<16x16xf32>
    %cst_64 = arith.constant dense<0.000000e+00> : vector<16x8xf32>
    %204 = tpu.matmul %203, %187, %cst_64 {dimension_numbers = #tpu.dot_dimension_numbers<[1], [0], [0], [1], [0, 0, 1, 1], [], []>} : vector<16x16xf32>, vector<16x8xf32>, vector<16x8xf32> -> vector<16x8xf32>
    %c16_65 = arith.constant 16 : index
    %c24_66 = arith.constant 24 : index
    %205 = vector.load %arg9[%c16_65, %c24_66] : memref<32x32xf32, #tpu.memory_space<vmem>>, vector<16x8xf32>
    tpu.vector_store %arg9[%c16_65, %c24_66], %204 {strides = array<i32>} : memref<32x32xf32, #tpu.memory_space<vmem>>, vector<16x8xf32>,
    %c0_67 = arith.constant 0 : index
    %c0_68 = arith.constant 0 : index
    %206 = vector.load %arg9[%c0_67, %c0_68] : memref<32x32xf32, #tpu.memory_space<vmem>>, vector<32x32xf32>
    %c0_69 = arith.constant 0 : index
    %c0_70 = arith.constant 0 : index
    %207 = vector.load %arg4[%c0_69, %c0_70] : memref<32x32xf32, #tpu.memory_space<vmem>>, vector<32x32xf32>
    %cst_71 = arith.constant dense<0.000000e+00> : vector<32x32xf32>
    %208 = tpu.matmul %206, %207, %cst_71 {dimension_numbers = #tpu.dot_dimension_numbers<[1], [0], [0], [1], [0, 0, 1, 1], [], []>} : vector<32x32xf32>, vector<32x32xf32>, vector<32x32xf32> -> vector<32x32xf32>
    %209 = vector.shape_cast %5 : vector<32xf32> to vector<1x32xf32>
    %210 = vector.broadcast %209 : vector<1x32xf32> to vector<32x32xf32>
    %211 = arith.addf %208, %210 : vector<32x32xf32>
    %212 = arith.addf %0, %211 : vector<32x32xf32>
    %cst_72 = arith.constant dense<0.000000e+00> : vector<32xf32>
    %213 = vector.multi_reduction <add>, %212, %cst_72 [1] : vector<32x32xf32> to vector<32xf32>
    %214 = vector.shape_cast %213 : vector<32xf32> to vector<32x1xf32>
    %cst_73 = arith.constant 3.200000e+01 : f32
    %215 = vector.broadcast %cst_73 : f32 to vector<32x1xf32>
    %216 = arith.divf %214, %215 : vector<32x1xf32>
    %217 = vector.broadcast %216 : vector<32x1xf32> to vector<32x32xf32>
    %218 = arith.subf %212, %217 : vector<32x32xf32>
    %219 = arith.mulf %218, %218 : vector<32x32xf32>
    %cst_74 = arith.constant dense<0.000000e+00> : vector<32xf32>
    %220 = vector.multi_reduction <add>, %219, %cst_74 [1] : vector<32x32xf32> to vector<32xf32>
    %221 = vector.shape_cast %220 : vector<32xf32> to vector<32x1xf32>
    %cst_75 = arith.constant 3.200000e+01 : f32
    %222 = vector.broadcast %cst_75 : f32 to vector<32x1xf32>
    %223 = arith.divf %221, %222 : vector<32x1xf32>
    %224 = vector.broadcast %216 : vector<32x1xf32> to vector<32x32xf32>
    %225 = arith.subf %212, %224 : vector<32x32xf32>
    %cst_76 = arith.constant 9.99999974E-6 : f32
    %226 = vector.broadcast %cst_76 : f32 to vector<32x1xf32>
    %227 = arith.addf %223, %226 : vector<32x1xf32>
    %228 = math.rsqrt %227 : vector<32x1xf32>
    %229 = vector.broadcast %228 : vector<32x1xf32> to vector<32x32xf32>
    %230 = arith.mulf %225, %229 : vector<32x32xf32>
    %231 = vector.shape_cast %7 : vector<32xf32> to vector<1x32xf32>
    %232 = vector.broadcast %231 : vector<1x32xf32> to vector<32x32xf32>
    %233 = arith.mulf %230, %232 : vector<32x32xf32>
    %234 = vector.shape_cast %9 : vector<32xf32> to vector<1x32xf32>
    %235 = vector.broadcast %234 : vector<1x32xf32> to vector<32x32xf32>
    %236 = arith.addf %233, %235 : vector<32x32xf32>
    %c0_77 = arith.constant 0 : index
    %c0_78 = arith.constant 0 : index
    %237 = vector.load %arg5[%c0_77, %c0_78] : memref<32x64xf32, #tpu.memory_space<vmem>>, vector<32x64xf32>
    %cst_79 = arith.constant dense<0.000000e+00> : vector<32x64xf32>
    %238 = tpu.matmul %236, %237, %cst_79 {dimension_numbers = #tpu.dot_dimension_numbers<[1], [0], [0], [1], [0, 0, 1, 1], [], []>} : vector<32x32xf32>, vector<32x64xf32>, vector<32x64xf32> -> vector<32x64xf32>
    %239 = vector.shape_cast %11 : vector<64xf32> to vector<1x64xf32>
    %240 = vector.broadcast %239 : vector<1x64xf32> to vector<32x64xf32>
    %241 = arith.addf %238, %240 : vector<32x64xf32>
    %cst_80 = arith.constant 0.000000e+00 : f32
    %242 = vector.broadcast %cst_80 : f32 to vector<32x64xf32>
    %243 = arith.maximumf %241, %242 : vector<32x64xf32>
    %c0_81 = arith.constant 0 : index
    %c0_82 = arith.constant 0 : index
    %244 = vector.load %arg6[%c0_81, %c0_82] : memref<64x32xf32, #tpu.memory_space<vmem>>, vector<64x32xf32>
    %cst_83 = arith.constant dense<0.000000e+00> : vector<32x32xf32>
    %245 = tpu.matmul %243, %244, %cst_83 {dimension_numbers = #tpu.dot_dimension_numbers<[1], [0], [0], [1], [0, 0, 1, 1], [], []>} : vector<32x64xf32>, vector<64x32xf32>, vector<32x32xf32> -> vector<32x32xf32>
    %246 = vector.shape_cast %13 : vector<32xf32> to vector<1x32xf32>
    %247 = vector.broadcast %246 : vector<1x32xf32> to vector<32x32xf32>
    %248 = arith.addf %245, %247 : vector<32x32xf32>
    %249 = arith.addf %236, %248 : vector<32x32xf32>
    %cst_84 = arith.constant dense<0.000000e+00> : vector<32xf32>
    %250 = vector.multi_reduction <add>, %249, %cst_84 [1] : vector<32x32xf32> to vector<32xf32>
    %251 = vector.shape_cast %250 : vector<32xf32> to vector<32x1xf32>
    %cst_85 = arith.constant 3.200000e+01 : f32
    %252 = vector.broadcast %cst_85 : f32 to vector<32x1xf32>
    %253 = arith.divf %251, %252 : vector<32x1xf32>
    %254 = vector.broadcast %253 : vector<32x1xf32> to vector<32x32xf32>
    %255 = arith.subf %249, %254 : vector<32x32xf32>
    %256 = arith.mulf %255, %255 : vector<32x32xf32>
    %cst_86 = arith.constant dense<0.000000e+00> : vector<32xf32>
    %257 = vector.multi_reduction <add>, %256, %cst_86 [1] : vector<32x32xf32> to vector<32xf32>
    %258 = vector.shape_cast %257 : vector<32xf32> to vector<32x1xf32>
    %cst_87 = arith.constant 3.200000e+01 : f32
    %259 = vector.broadcast %cst_87 : f32 to vector<32x1xf32>
    %260 = arith.divf %258, %259 : vector<32x1xf32>
    %261 = vector.broadcast %253 : vector<32x1xf32> to vector<32x32xf32>
    %262 = arith.subf %249, %261 : vector<32x32xf32>
    %cst_88 = arith.constant 9.99999974E-6 : f32
    %263 = vector.broadcast %cst_88 : f32 to vector<32x1xf32>
    %264 = arith.addf %260, %263 : vector<32x1xf32>
    %265 = math.rsqrt %264 : vector<32x1xf32>
    %266 = vector.broadcast %265 : vector<32x1xf32> to vector<32x32xf32>
    %267 = arith.mulf %262, %266 : vector<32x32xf32>
    %268 = vector.shape_cast %15 : vector<32xf32> to vector<1x32xf32>
    %269 = vector.broadcast %268 : vector<1x32xf32> to vector<32x32xf32>
    %270 = arith.mulf %267, %269 : vector<32x32xf32>
    %271 = vector.shape_cast %17 : vector<32xf32> to vector<1x32xf32>
    %272 = vector.broadcast %271 : vector<1x32xf32> to vector<32x32xf32>
    %273 = arith.addf %270, %272 : vector<32x32xf32>
    %c0_89 = arith.constant 0 : index
    %c0_90 = arith.constant 0 : index
    %274 = vector.load %arg8[%c0_89, %c0_90] : memref<32x32xf32, #tpu.memory_space<vmem>>, vector<32x32xf32>
    tpu.vector_store %arg8[%c0_89, %c0_90], %273 {strides = array<i32>} : memref<32x32xf32, #tpu.memory_space<vmem>>, vector<32x32xf32>,
    return
  }
  func.func @transform_0(%arg0: i32) -> (i32, i32) {
    %c0_i32 = arith.constant 0 : i32
    %c0_i32_0 = arith.constant 0 : i32
    return %arg0, %c0_i32 : i32, i32
  }
  func.func @transform_1(%arg0: i32) -> (i32, i32, i32) {
    %c0_i32 = arith.constant 0 : i32
    %c0_i32_0 = arith.constant 0 : i32
    %c0_i32_1 = arith.constant 0 : i32
    return %arg0, %c0_i32, %c0_i32_0 : i32, i32, i32
  }
  func.func @transform_2(%arg0: i32) -> (i32, i32) {
    %c0_i32 = arith.constant 0 : i32
    %c0_i32_0 = arith.constant 0 : i32
    %c0_i32_1 = arith.constant 0 : i32
    return %c0_i32, %c0_i32_0 : i32, i32
  }
  func.func @transform_3(%arg0: i32) -> (i32, i32) {
    %c0_i32 = arith.constant 0 : i32
    %c0_i32_0 = arith.constant 0 : i32
    %c0_i32_1 = arith.constant 0 : i32
    return %c0_i32, %c0_i32_0 : i32, i32
  }
  func.func @transform_4(%arg0: i32) -> (i32, i32) {
    %c0_i32 = arith.constant 0 : i32
    %c0_i32_0 = arith.constant 0 : i32
    %c0_i32_1 = arith.constant 0 : i32
    return %c0_i32, %c0_i32_0 : i32, i32
  }
  func.func @transform_5(%arg0: i32) -> (i32, i32) {
    %c0_i32 = arith.constant 0 : i32
    %c0_i32_0 = arith.constant 0 : i32
    %c0_i32_1 = arith.constant 0 : i32
    return %c0_i32, %c0_i32_0 : i32, i32
  }
  func.func @transform_6(%arg0: i32) -> (i32, i32) {
    %c0_i32 = arith.constant 0 : i32
    %c0_i32_0 = arith.constant 0 : i32
    %c0_i32_1 = arith.constant 0 : i32
    return %c0_i32, %c0_i32_0 : i32, i32
  }
  func.func @transform_7(%arg0: i32) -> (i32, i32) {
    %c0_i32 = arith.constant 0 : i32
    %c0_i32_0 = arith.constant 0 : i32
    return %arg0, %c0_i32 : i32, i32
  }
}

</mosaic_0001>

<llo_original>
// kernel: tpu_custom_call.1
$region0: #{tpu_custom_call.1}
  #allocation0 [shape = 'u32[]', space=smem, size = 0x4, offset = 0x4, fixed_abs, tag = 'smem constant byte address 0x4 - core index']
  #allocation1 [shape = 'u32[144,128]{1,0:T(1,128)}', space=vmem, size = 0x12000, scoped, tag = 'internal scratch']
  #allocation2 [shape = 'f32[32,32]{1,0:T(8,128)}', space=vmem, size = 0x4000, scoped, tag = 'scratch operand']
  %s0 = inlined_call_operand.vmem [shape: f32[32,32], index: 0, kind: input, shape index: {}]
  %s1 = inlined_call_operand.vmem [shape: f32[2,1,16], index: 1, kind: input, shape index: {}]
  %s2 = inlined_call_operand.vmem [shape: f32[32,96], index: 2, kind: input, shape index: {}]
  %s3 = inlined_call_operand.vmem [shape: f32[32,32], index: 3, kind: input, shape index: {}]
  %s4 = inlined_call_operand.hbm [shape: f32[32,64], index: 4, kind: input, shape index: {}]
  %s5 = inlined_call_operand.vmem [shape: f32[64,32], index: 5, kind: input, shape index: {}]
  %s6 = inlined_call_operand.vmem [shape: f32[8,128], index: 6, kind: input, shape index: {}]
  %s7 = inlined_call_operand.hbm [shape: f32[32,32], index: 7, kind: output, shape index: {}]
  %s8 = sld [smem:[#allocation0]]
  $region42: #{tpu_custom_call.1} parent=0
    _
  %s10 = ssub.s32 1, %s8
  %s11 = scalar_select 0, %s10, %s8
  $region1: #{tpu_custom_call.1} parent=0
    #allocation3 [shape = 'u8[16384]{0}', space=vmem, size = 0x4000, scoped, tag = 'input window, operand 4, single buffered']
    #allocation4 [shape = 's32[1]{0}', space=sflag, size = 0x4, scoped, tag = 'scoped memory for tpu_custom_call.1']
    #allocation5 [shape = 's32[1]{0}', space=sflag, size = 0x4, scoped, tag = 'scoped memory for tpu_custom_call.1']
    #allocation6 [shape = 'u8[16384]{0}', space=vmem, size = 0x4000, scoped, tag = 'output window, operand 0, single buffered']
    %12 = vsyncpa [#allocation4], 0
    %13 = vsyncpa [#allocation5], 0
    // Predicated region
    $region2: #{tpu_custom_call.1} parent=1 // pred_check
      _
    $region3: #{tpu_custom_call.1} parent=1 // pred_check_branch
      %15 = sbr.rel (0) target = $region5
    $region4: #{tpu_custom_call.1} parent=1 // pred_region
      _
    $region5: #{tpu_custom_call.1} parent=1 // pred_fallthru
      _
    // Predicated region
    $region6: #{tpu_custom_call.1} parent=1 // pred_check
      _
    $region7: #{tpu_custom_call.1} parent=1 // pred_check_branch
      %17 = sbr.rel (0) target = $region9
    $region8: #{tpu_custom_call.1} parent=1 // pred_region
      _
    $region9: #{tpu_custom_call.1} parent=1 // pred_fallthru
      _
    // Predicated region
    $region10: #{tpu_custom_call.1} parent=1 // pred_check
      _
    $region11: #{tpu_custom_call.1} parent=1 // pred_check_branch
      %19 = sbr.rel (0) target = $region13
    $region12: #{tpu_custom_call.1} parent=1 // pred_region
      _
    $region13: #{tpu_custom_call.1} parent=1 // pred_fallthru
      _
    // Predicated region
    $region14: #{tpu_custom_call.1} parent=1 // pred_check
      _
    $region15: #{tpu_custom_call.1} parent=1 // pred_check_branch
      %21 = sbr.rel (0) target = $region17
    $region16: #{tpu_custom_call.1} parent=1 // pred_region
      _
    $region17: #{tpu_custom_call.1} parent=1 // pred_fallthru
      _
    // Predicated region
    $region18: #{tpu_custom_call.1} parent=1 // pred_check
      _
    $region19: #{tpu_custom_call.1} parent=1 // pred_check_branch
      %23 = sbr.rel (0) target = $region21
    $region20: #{tpu_custom_call.1} parent=1 // pred_region
      %s25 = ssub.s32 512, 512
      %26 = vsyncadd [#allocation4], %s25
      %s27 = sshll.u32 [#allocation3], 4
      %s28 = int_to_ptr.vmem [resolvable:$true] %s27
      %33 = dma.hbm_to_vmem [thread:$0]  %s4, 512, %s28, [#allocation4], 128, 128, 8
    $region21: #{tpu_custom_call.1} parent=1 // pred_fallthru
      _
    // Predicated region
    $region22: #{tpu_custom_call.1} parent=1 // pred_check
      _
    $region23: #{tpu_custom_call.1} parent=1 // pred_check_branch
      %35 = sbr.rel (0) target = $region25
    $region24: #{tpu_custom_call.1} parent=1 // pred_region
      _
    $region25: #{tpu_custom_call.1} parent=1 // pred_fallthru
      _
    // Predicated region
    $region26: #{tpu_custom_call.1} parent=1 // pred_check
      _
    $region27: #{tpu_custom_call.1} parent=1 // pred_check_branch
      %37 = sbr.rel (0) target = $region29
    $region28: #{tpu_custom_call.1} parent=1 // pred_region
      _
    $region29: #{tpu_custom_call.1} parent=1 // pred_fallthru
      _
    // Predicated region
    $region30: #{tpu_custom_call.1} parent=1 // pred_check
      _
    $region31: #{tpu_custom_call.1} parent=1 // pred_check_branch
      %39 = sbr.rel (0) target = $region33
    $region32: #{tpu_custom_call.1} parent=1 // pred_region
      %40 = dma.done [#allocation4], 512
    $region33: #{tpu_custom_call.1} parent=1 // pred_fallthru
      _
    %v41 = vld [vmem:[%s0] sm:$0xff]
    %v42 = vld [vmem:[%s0 + $0x8] sm:$0xff]
    %v43 = vld [vmem:[%s0 + $0x10] sm:$0xff]
    %v44 = vld [vmem:[%s0 + $0x18] sm:$0xff]
    %v45 = vld [vmem:[%s6] sm:$0xff]
    %v46 = vld [vmem:[%s2] sm:$0xff]
    %v47 = vld [vmem:[%s2 + $0x8] sm:$0xff]
    %v48 = vld [vmem:[%s2 + $0x10] sm:$0xff]
    %v49 = vld [vmem:[%s2 + $0x18] sm:$0xff]
    %v50 = vlaneseq
    %v51 = vshrl.u32 %v50, 7
    %v52 = vsub.s32 0, %v51
    %v53 = vrot.slane %v45, %v52
    %vm54 = vcmask 261120
    %v56 = vsel %vm54, %v41, 0
    %v59 = vsel %vm54, %v42, 0
    %v62 = vsel %vm54, %v43, 0
    %v65 = vsel %vm54, %v44, 0
    %67 = vmatprep.subr.mxu0 0.0
    %68 = vmatpush1.msra.mxu0 %v46
    %69 = vmatprep.subr.mxu0 0.0
    %70 = vmatpush1.msra.mxu0 %v47
    %71 = vmatprep.subr.mxu0 0.0
    %72 = vmatpush1.msra.mxu0 %v48
    %73 = vmatprep.subr.mxu0 0.0
    %74 = vmatpush1.msra.mxu0 %v49
    %75 = vmatprep.subr.mxu0 0.0
    %76 = vmatpush1.msra.mxu0 0.0
    %77 = vmatprep.subr.mxu0 0.0
    %78 = vmatpush1.msra.mxu0 0.0
    %79 = vmatprep.subr.mxu0 0.0
    %80 = vmatpush1.msra.mxu0 0.0
    %81 = vmatprep.subr.mxu0 0.0
    %82 = vmatpush1.msra.mxu0 0.0
    %83 = vmatprep.subr.mxu0 0.0
    %84 = vmatpush1.msra.mxu0 0.0
    %85 = vmatprep.subr.mxu0 0.0
    %86 = vmatpush1.msra.mxu0 0.0
    %87 = vmatprep.subr.mxu0 0.0
    %88 = vmatpush1.msra.mxu0 0.0
    %89 = vmatprep.subr.mxu0 0.0
    %90 = vmatpush1.msra.mxu0 0.0
    %91 = vmatprep.subr.mxu0 0.0
    %92 = vmatpush1.msra.mxu0 0.0
    %93 = vmatprep.subr.mxu0 0.0
    %94 = vmatpush1.msra.mxu0 0.0
    %95 = vmatprep.subr.mxu0 0.0
    %96 = vmatpush1.msra.mxu0 0.0
    %97 = vmatprep.subr.mxu0 0.0
    %98 = vmatpush1.msra.mxu0 0.0
    %99 = vmatprep.subr.mxu0 0.0
    %100 = vmatpush1.msra.mxu0 0.0
    %101 = vmatprep.subr.mxu0 0.0
    %102 = vmatpush1.msra.mxu0 0.0
    %103 = vmatprep.subr.mxu0 0.0
    %104 = vmatpush1.msra.mxu0 0.0
    %105 = vmatprep.subr.mxu0 0.0
    %106 = vmatpush1.msra.mxu0 0.0
    %107 = vmatprep.subr.mxu0 0.0
    %108 = vmatpush1.msra.mxu0 0.0
    %109 = vmatprep.subr.mxu0 0.0
    %110 = vmatpush1.msra.mxu0 0.0
    %111 = vmatprep.subr.mxu0 0.0
    %112 = vmatpush1.msra.mxu0 0.0
    %113 = vmatprep.subr.mxu0 0.0
    %114 = vmatpush1.msra.mxu0 0.0
    %115 = vmatprep.subr.mxu0 0.0
    %116 = vmatpush1.msra.mxu0 0.0
    %117 = vmatprep.subr.mxu0 0.0
    %118 = vmatpush1.msra.mxu0 0.0
    %119 = vmatprep.subr.mxu0 0.0
    %120 = vmatpush1.msra.mxu0 0.0
    %121 = vmatprep.subr.mxu0 0.0
    %122 = vmatpush1.msra.mxu0 0.0
    %123 = vmatprep.subr.mxu0 0.0
    %124 = vmatpush1.msra.mxu0 0.0
    %125 = vmatprep.subr.mxu0 0.0
    %126 = vmatpush1.msra.mxu0 0.0
    %127 = vmatprep.subr.mxu0 0.0
    %128 = vmatpush1.msra.mxu0 0.0
    %129 = vmatprep.subr.mxu0 0.0
    %130 = vmatpush1.msra.mxu0 0.0
    %131 = vmatprep.mubr.f32.mxu0 0.0
    %132 = vmatmul.mubr.f32.gmra.mrb[0].mxu0 %v56
    %v133 = vpop.f32.mrb[0].mxu0
    %v134 = vadd.f32 %v53, %v133
    %v135 = vpop.f32.mrb[0].mxu0
    %136 = vmatprep.mubr.f32.mxu0 0.0
    %137 = vmatmul.mubr.f32.gmra.mrb[0].mxu0 %v59
    %v138 = vpop.f32.mrb[0].mxu0
    %v139 = vadd.f32 %v53, %v138
    %v140 = vpop.f32.mrb[0].mxu0
    %141 = vmatprep.mubr.f32.mxu0 0.0
    %142 = vmatmul.mubr.f32.gmra.mrb[0].mxu0 %v62
    %v143 = vpop.f32.mrb[0].mxu0
    %v144 = vadd.f32 %v53, %v143
    %v145 = vpop.f32.mrb[0].mxu0
    %146 = vmatprep.mubr.f32.mxu0 0.0
    %147 = vmatmul.mubr.f32.gmra.mrb[0].mxu0 %v65
    %v148 = vpop.f32.mrb[0].mxu0
    %v149 = vadd.f32 %v53, %v148
    %v150 = vpop.f32.mrb[0].mxu0
    %151 = vdwg.mxu0
    %v152 = vld [vmem:[%s1] sm:$0x1]
    %v153 = vld [vmem:[%s1 + $0x1] sm:$0x1]
    %vm154 = vcmp.eq.f32.partialorder %v152, 0.0
    %v155 = vsel %vm154, -1e+10, 0.0
    %158 = vrot.lane.b32.xlu0 %v134, 96
    %v159 = vpop.permute.xlu0 %158
    %160 = vrot.lane.b32.xlu0 %v139, 96
    %v161 = vpop.permute.xlu0 %160
    %vm162 = vcmask 64512
    %v163 = vsel %vm162, %v134, 0
    %v165 = vsel %vm162, %v139, 0
    %v167 = vsel %vm162, %v159, 0
    %v169 = vsel %vm162, %v161, 0
    %171 = vmatprep.subr.mxu0 0.0
    %172 = vmatpush1.xpose.msra.mxu0 %v167
    %173 = vmatprep.subr.mxu0 0.0
    %174 = vmatpush1.xpose.msra.mxu0 %v169
    %175 = vmatprep.subr.mxu0 0.0
    %176 = vmatpush1.xpose.msra.mxu0 0.0
    %177 = vmatprep.subr.mxu0 0.0
    %178 = vmatpush1.xpose.msra.mxu0 0.0
    %179 = vmatprep.subr.mxu0 0.0
    %180 = vmatpush1.xpose.msra.mxu0 0.0
    %181 = vmatprep.subr.mxu0 0.0
    %182 = vmatpush1.xpose.msra.mxu0 0.0
    %183 = vmatprep.subr.mxu0 0.0
    %184 = vmatpush1.xpose.msra.mxu0 0.0
    %185 = vmatprep.subr.mxu0 0.0
    %186 = vmatpush1.xpose.msra.mxu0 0.0
    %187 = vmatprep.subr.mxu0 0.0
    %188 = vmatpush1.xpose.msra.mxu0 0.0
    %189 = vmatprep.subr.mxu0 0.0
    %190 = vmatpush1.xpose.msra.mxu0 0.0
    %191 = vmatprep.subr.mxu0 0.0
    %192 = vmatpush1.xpose.msra.mxu0 0.0
    %193 = vmatprep.subr.mxu0 0.0
    %194 = vmatpush1.xpose.msra.mxu0 0.0
    %195 = vmatprep.subr.mxu0 0.0
    %196 = vmatpush1.xpose.msra.mxu0 0.0
    %197 = vmatprep.subr.mxu0 0.0
    %198 = vmatpush1.xpose.msra.mxu0 0.0
    %199 = vmatprep.subr.mxu0 0.0
    %200 = vmatpush1.xpose.msra.mxu0 0.0
    %201 = vmatprep.subr.mxu0 0.0
    %202 = vmatpush1.xpose.msra.mxu0 0.0
    %203 = vmatprep.subr.mxu0 0.0
    %204 = vmatpush1.xpose.msra.mxu0 0.0
    %205 = vmatprep.subr.mxu0 0.0
    %206 = vmatpush1.xpose.msra.mxu0 0.0
    %207 = vmatprep.subr.mxu0 0.0
    %208 = vmatpush1.xpose.msra.mxu0 0.0
    %209 = vmatprep.subr.mxu0 0.0
    %210 = vmatpush1.xpose.msra.mxu0 0.0
    %211 = vmatprep.subr.mxu0 0.0
    %212 = vmatpush1.xpose.msra.mxu0 0.0
    %213 = vmatprep.subr.mxu0 0.0
    %214 = vmatpush1.xpose.msra.mxu0 0.0
    %215 = vmatprep.subr.mxu0 0.0
    %216 = vmatpush1.xpose.msra.mxu0 0.0
    %217 = vmatprep.subr.mxu0 0.0
    %218 = vmatpush1.xpose.msra.mxu0 0.0
    %219 = vmatprep.subr.mxu0 0.0
    %220 = vmatpush1.xpose.msra.mxu0 0.0
    %221 = vmatprep.subr.mxu0 0.0
    %222 = vmatpush1.xpose.msra.mxu0 0.0
    %223 = vmatprep.subr.mxu0 0.0
    %224 = vmatpush1.xpose.msra.mxu0 0.0
    %225 = vmatprep.subr.mxu0 0.0
    %226 = vmatpush1.xpose.msra.mxu0 0.0
    %227 = vmatprep.subr.mxu0 0.0
    %228 = vmatpush1.xpose.msra.mxu0 0.0
    %229 = vmatprep.subr.mxu0 0.0
    %230 = vmatpush1.xpose.msra.mxu0 0.0
    %231 = vmatprep.subr.mxu0 0.0
    %232 = vmatpush1.xpose.msra.mxu0 0.0
    %233 = vmatprep.subr.mxu0 0.0
    %234 = vmatpush1.xpose.msra.mxu0 0.0
    %235 = vmatprep.mubr.f32.mxu0 0.0
    %236 = vmatmul.mubr.f32.gmra.mrb[0].mxu0 %v163
    %v237 = vpop.f32.mrb[0].mxu0
    %v238 = vadd.f32 0.0, %v237
    %v239 = vpop.f32.mrb[0].mxu0
    %240 = vmatprep.mubr.f32.mxu0 0.0
    %241 = vmatmul.mubr.f32.gmra.mrb[0].mxu0 %v165
    %v242 = vpop.f32.mrb[0].mxu0
    %v243 = vadd.f32 0.0, %v242
    %v244 = vpop.f32.mrb[0].mxu0
    %245 = vdwg.mxu0
    %v246 = vmul.f32 %v238, 0.35355338
    %v247 = vmul.f32 %v243, 0.35355338
    %v249 = vlaneseq
    %v250 = vshrl.u32 %v249, 7
    %v251 = vsub.s32 0, %v250
    %v252 = vrot.slane %v155, %v251
    %v254 = vadd.f32 %v246, %v252
    %v255 = vadd.f32 %v247, %v252
    %vm256 = vcmask 130048
    %v257 = vsel %vm256, %v254, -inf
    %258 = vmax.xlane.f32.xlu0 %v257
    %v259 = vpop.xlane.xlu0 %258
    %v260 = vsel %vm256, %v255, -inf
    %261 = vmax.xlane.f32.xlu0 %v260
    %v262 = vpop.xlane.xlu0 %261
    %v263 = vsub.f32 %v254, %v259
    %v264 = vsub.f32 %v255, %v262
    %v265 = vmul.f32 %v263, 1.442695
    %v266 = vpow.pop %v265
    %v267 = vmul.f32 %v264, 1.442695
    %v268 = vpow.pop %v267
    %v269 = vsel %vm256, %v266, 0.0
    %270 = vadd.xlane.f32.xlu0 %v269
    %v271 = vpop.xlane.xlu0 %270
    %v272 = vsel %vm256, %v268, 0.0
    %273 = vadd.xlane.f32.xlu0 %v272
    %v274 = vpop.xlane.xlu0 %273
    %v275 = vrcp.pop %v271
    %v276 = vrcp.pop %v274
    %v277 = vmul.f32 %v266, %v275
    %v278 = vmul.f32 %v268, %v276
    %279 = vrot.lane.b32.xlu0 %v134, 64
    %v280 = vpop.permute.xlu0 %279
    %281 = vrot.lane.b32.xlu0 %v139, 64
    %v282 = vpop.permute.xlu0 %281
    %v286 = vsel %vm256, %v277, 0
    %v289 = vsel %vm256, %v278, 0
    %291 = vmatprep.subr.mxu0 0.0
    %292 = vmatpush1.msra.mxu0 %v280
    %293 = vmatprep.subr.mxu0 0.0
    %294 = vmatpush1.msra.mxu0 %v282
    %295 = vmatprep.subr.mxu0 0.0
    %296 = vmatpush1.msra.mxu0 0.0
    %297 = vmatprep.subr.mxu0 0.0
    %298 = vmatpush1.msra.mxu0 0.0
    %299 = vmatprep.subr.mxu0 0.0
    %300 = vmatpush1.msra.mxu0 0.0
    %301 = vmatprep.subr.mxu0 0.0
    %302 = vmatpush1.msra.mxu0 0.0
    %303 = vmatprep.subr.mxu0 0.0
    %304 = vmatpush1.msra.mxu0 0.0
    %305 = vmatprep.subr.mxu0 0.0
    %306 = vmatpush1.msra.mxu0 0.0
    %307 = vmatprep.subr.mxu0 0.0
    %308 = vmatpush1.msra.mxu0 0.0
    %309 = vmatprep.subr.mxu0 0.0
    %310 = vmatpush1.msra.mxu0 0.0
    %311 = vmatprep.subr.mxu0 0.0
    %312 = vmatpush1.msra.mxu0 0.0
    %313 = vmatprep.subr.mxu0 0.0
    %314 = vmatpush1.msra.mxu0 0.0
    %315 = vmatprep.subr.mxu0 0.0
    %316 = vmatpush1.msra.mxu0 0.0
    %317 = vmatprep.subr.mxu0 0.0
    %318 = vmatpush1.msra.mxu0 0.0
    %319 = vmatprep.subr.mxu0 0.0
    %320 = vmatpush1.msra.mxu0 0.0
    %321 = vmatprep.subr.mxu0 0.0
    %322 = vmatpush1.msra.mxu0 0.0
    %323 = vmatprep.subr.mxu0 0.0
    %324 = vmatpush1.msra.mxu0 0.0
    %325 = vmatprep.subr.mxu0 0.0
    %326 = vmatpush1.msra.mxu0 0.0
    %327 = vmatprep.subr.mxu0 0.0
    %328 = vmatpush1.msra.mxu0 0.0
    %329 = vmatprep.subr.mxu0 0.0
    %330 = vmatpush1.msra.mxu0 0.0
    %331 = vmatprep.subr.mxu0 0.0
    %332 = vmatpush1.msra.mxu0 0.0
    %333 = vmatprep.subr.mxu0 0.0
    %334 = vmatpush1.msra.mxu0 0.0
    %335 = vmatprep.subr.mxu0 0.0
    %336 = vmatpush1.msra.mxu0 0.0
    %337 = vmatprep.subr.mxu0 0.0
    %338 = vmatpush1.msra.mxu0 0.0
    %339 = vmatprep.subr.mxu0 0.0
    %340 = vmatpush1.msra.mxu0 0.0
    %341 = vmatprep.subr.mxu0 0.0
    %342 = vmatpush1.msra.mxu0 0.0
    %343 = vmatprep.subr.mxu0 0.0
    %344 = vmatpush1.msra.mxu0 0.0
    %345 = vmatprep.subr.mxu0 0.0
    %346 = vmatpush1.msra.mxu0 0.0
    %347 = vmatprep.subr.mxu0 0.0
    %348 = vmatpush1.msra.mxu0 0.0
    %349 = vmatprep.subr.mxu0 0.0
    %350 = vmatpush1.msra.mxu0 0.0
    %351 = vmatprep.subr.mxu0 0.0
    %352 = vmatpush1.msra.mxu0 0.0
    %353 = vmatprep.subr.mxu0 0.0
    %354 = vmatpush1.msra.mxu0 0.0
    %355 = vmatprep.mubr.f32.mxu0 0.0
    %356 = vmatmul.mubr.f32.gmra.mrb[0].mxu0 %v286
    %v357 = vpop.f32.mrb[0].mxu0
    %v358 = vadd.f32 0.0, %v357
    %v359 = vpop.f32.mrb[0].mxu0
    %360 = vmatprep.mubr.f32.mxu0 0.0
    %361 = vmatmul.mubr.f32.gmra.mrb[0].mxu0 %v289
    %v362 = vpop.f32.mrb[0].mxu0
    %v363 = vadd.f32 0.0, %v362
    %v364 = vpop.f32.mrb[0].mxu0
    %365 = vdwg.mxu0
    %366 = vst.msk [vmem:[#allocation2] sm:$0xff] %vm162, %v358
    %367 = vst.msk [vmem:[#allocation2 + $0x8] sm:$0xff] %vm162, %v363
    %368 = vrot.lane.b32.xlu0 %v134, 120
    %v369 = vpop.permute.xlu0 %368
    %370 = vrot.lane.b32.xlu0 %v139, 120
    %v371 = vpop.permute.xlu0 %370
    %372 = vrot.lane.b32.xlu0 %v134, 88
    %v373 = vpop.permute.xlu0 %372
    %374 = vrot.lane.b32.xlu0 %v139, 88
    %v375 = vpop.permute.xlu0 %374
    %v376 = vsel %vm162, %v369, 0
    %v378 = vsel %vm162, %v371, 0
    %v380 = vsel %vm162, %v373, 0
    %v382 = vsel %vm162, %v375, 0
    %384 = vmatprep.subr.mxu0 0.0
    %385 = vmatpush1.xpose.msra.mxu0 %v380
    %386 = vmatprep.subr.mxu0 0.0
    %387 = vmatpush1.xpose.msra.mxu0 %v382
    %388 = vmatprep.subr.mxu0 0.0
    %389 = vmatpush1.xpose.msra.mxu0 0.0
    %390 = vmatprep.subr.mxu0 0.0
    %391 = vmatpush1.xpose.msra.mxu0 0.0
    %392 = vmatprep.subr.mxu0 0.0
    %393 = vmatpush1.xpose.msra.mxu0 0.0
    %394 = vmatprep.subr.mxu0 0.0
    %395 = vmatpush1.xpose.msra.mxu0 0.0
    %396 = vmatprep.subr.mxu0 0.0
    %397 = vmatpush1.xpose.msra.mxu0 0.0
    %398 = vmatprep.subr.mxu0 0.0
    %399 = vmatpush1.xpose.msra.mxu0 0.0
    %400 = vmatprep.subr.mxu0 0.0
    %401 = vmatpush1.xpose.msra.mxu0 0.0
    %402 = vmatprep.subr.mxu0 0.0
    %403 = vmatpush1.xpose.msra.mxu0 0.0
    %404 = vmatprep.subr.mxu0 0.0
    %405 = vmatpush1.xpose.msra.mxu0 0.0
    %406 = vmatprep.subr.mxu0 0.0
    %407 = vmatpush1.xpose.msra.mxu0 0.0
    %408 = vmatprep.subr.mxu0 0.0
    %409 = vmatpush1.xpose.msra.mxu0 0.0
    %410 = vmatprep.subr.mxu0 0.0
    %411 = vmatpush1.xpose.msra.mxu0 0.0
    %412 = vmatprep.subr.mxu0 0.0
    %413 = vmatpush1.xpose.msra.mxu0 0.0
    %414 = vmatprep.subr.mxu0 0.0
    %415 = vmatpush1.xpose.msra.mxu0 0.0
    %416 = vmatprep.subr.mxu0 0.0
    %417 = vmatpush1.xpose.msra.mxu0 0.0
    %418 = vmatprep.subr.mxu0 0.0
    %419 = vmatpush1.xpose.msra.mxu0 0.0
    %420 = vmatprep.subr.mxu0 0.0
    %421 = vmatpush1.xpose.msra.mxu0 0.0
    %422 = vmatprep.subr.mxu0 0.0
    %423 = vmatpush1.xpose.msra.mxu0 0.0
    %424 = vmatprep.subr.mxu0 0.0
    %425 = vmatpush1.xpose.msra.mxu0 0.0
    %426 = vmatprep.subr.mxu0 0.0
    %427 = vmatpush1.xpose.msra.mxu0 0.0
    %428 = vmatprep.subr.mxu0 0.0
    %429 = vmatpush1.xpose.msra.mxu0 0.0
    %430 = vmatprep.subr.mxu0 0.0
    %431 = vmatpush1.xpose.msra.mxu0 0.0
    %432 = vmatprep.subr.mxu0 0.0
    %433 = vmatpush1.xpose.msra.mxu0 0.0
    %434 = vmatprep.subr.mxu0 0.0
    %435 = vmatpush1.xpose.msra.mxu0 0.0
    %436 = vmatprep.subr.mxu0 0.0
    %437 = vmatpush1.xpose.msra.mxu0 0.0
    %438 = vmatprep.subr.mxu0 0.0
    %439 = vmatpush1.xpose.msra.mxu0 0.0
    %440 = vmatprep.subr.mxu0 0.0
    %441 = vmatpush1.xpose.msra.mxu0 0.0
    %442 = vmatprep.subr.mxu0 0.0
    %443 = vmatpush1.xpose.msra.mxu0 0.0
    %444 = vmatprep.subr.mxu0 0.0
    %445 = vmatpush1.xpose.msra.mxu0 0.0
    %446 = vmatprep.subr.mxu0 0.0
    %447 = vmatpush1.xpose.msra.mxu0 0.0
    %448 = vmatprep.mubr.f32.mxu0 0.0
    %449 = vmatmul.mubr.f32.gmra.mrb[0].mxu0 %v376
    %v450 = vpop.f32.mrb[0].mxu0
    %v451 = vadd.f32 0.0, %v450
    %v452 = vpop.f32.mrb[0].mxu0
    %453 = vmatprep.mubr.f32.mxu0 0.0
    %454 = vmatmul.mubr.f32.gmra.mrb[0].mxu0 %v378
    %v455 = vpop.f32.mrb[0].mxu0
    %v456 = vadd.f32 0.0, %v455
    %v457 = vpop.f32.mrb[0].mxu0
    %458 = vdwg.mxu0
    %v459 = vmul.f32 %v451, 0.35355338
    %v460 = vmul.f32 %v456, 0.35355338
    %v461 = vadd.f32 %v459, %v252
    %v462 = vadd.f32 %v460, %v252
    %v463 = vsel %vm256, %v461, -inf
    %464 = vmax.xlane.f32.xlu0 %v463
    %v465 = vpop.xlane.xlu0 %464
    %v466 = vsel %vm256, %v462, -inf
    %467 = vmax.xlane.f32.xlu0 %v466
    %v468 = vpop.xlane.xlu0 %467
    %v469 = vsub.f32 %v461, %v465
    %v470 = vsub.f32 %v462, %v468
    %v471 = vmul.f32 %v469, 1.442695
    %v472 = vpow.pop %v471
    %v473 = vmul.f32 %v470, 1.442695
    %v474 = vpow.pop %v473
    %v475 = vsel %vm256, %v472, 0.0
    %476 = vadd.xlane.f32.xlu0 %v475
    %v477 = vpop.xlane.xlu0 %476
    %v478 = vsel %vm256, %v474, 0.0
    %479 = vadd.xlane.f32.xlu0 %v478
    %v480 = vpop.xlane.xlu0 %479
    %v481 = vrcp.pop %v477
    %v482 = vrcp.pop %v480
    %v483 = vmul.f32 %v472, %v481
    %v484 = vmul.f32 %v474, %v482
    %485 = vrot.lane.b32.xlu0 %v134, 56
    %v486 = vpop.permute.xlu0 %485
    %487 = vrot.lane.b32.xlu0 %v139, 56
    %v488 = vpop.permute.xlu0 %487
    %v492 = vsel %vm256, %v483, 0
    %v495 = vsel %vm256, %v484, 0
    %497 = vmatprep.subr.mxu0 0.0
    %498 = vmatpush1.msra.mxu0 %v486
    %499 = vmatprep.subr.mxu0 0.0
    %500 = vmatpush1.msra.mxu0 %v488
    %501 = vmatprep.subr.mxu0 0.0
    %502 = vmatpush1.msra.mxu0 0.0
    %503 = vmatprep.subr.mxu0 0.0
    %504 = vmatpush1.msra.mxu0 0.0
    %505 = vmatprep.subr.mxu0 0.0
    %506 = vmatpush1.msra.mxu0 0.0
    %507 = vmatprep.subr.mxu0 0.0
    %508 = vmatpush1.msra.mxu0 0.0
    %509 = vmatprep.subr.mxu0 0.0
    %510 = vmatpush1.msra.mxu0 0.0
    %511 = vmatprep.subr.mxu0 0.0
    %512 = vmatpush1.msra.mxu0 0.0
    %513 = vmatprep.subr.mxu0 0.0
    %514 = vmatpush1.msra.mxu0 0.0
    %515 = vmatprep.subr.mxu0 0.0
    %516 = vmatpush1.msra.mxu0 0.0
    %517 = vmatprep.subr.mxu0 0.0
    %518 = vmatpush1.msra.mxu0 0.0
    %519 = vmatprep.subr.mxu0 0.0
    %520 = vmatpush1.msra.mxu0 0.0
    %521 = vmatprep.subr.mxu0 0.0
    %522 = vmatpush1.msra.mxu0 0.0
    %523 = vmatprep.subr.mxu0 0.0
    %524 = vmatpush1.msra.mxu0 0.0
    %525 = vmatprep.subr.mxu0 0.0
    %526 = vmatpush1.msra.mxu0 0.0
    %527 = vmatprep.subr.mxu0 0.0
    %528 = vmatpush1.msra.mxu0 0.0
    %529 = vmatprep.subr.mxu0 0.0
    %530 = vmatpush1.msra.mxu0 0.0
    %531 = vmatprep.subr.mxu0 0.0
    %532 = vmatpush1.msra.mxu0 0.0
    %533 = vmatprep.subr.mxu0 0.0
    %534 = vmatpush1.msra.mxu0 0.0
    %535 = vmatprep.subr.mxu0 0.0
    %536 = vmatpush1.msra.mxu0 0.0
    %537 = vmatprep.subr.mxu0 0.0
    %538 = vmatpush1.msra.mxu0 0.0
    %539 = vmatprep.subr.mxu0 0.0
    %540 = vmatpush1.msra.mxu0 0.0
    %541 = vmatprep.subr.mxu0 0.0
    %542 = vmatpush1.msra.mxu0 0.0
    %543 = vmatprep.subr.mxu0 0.0
    %544 = vmatpush1.msra.mxu0 0.0
    %545 = vmatprep.subr.mxu0 0.0
    %546 = vmatpush1.msra.mxu0 0.0
    %547 = vmatprep.subr.mxu0 0.0
    %548 = vmatpush1.msra.mxu0 0.0
    %549 = vmatprep.subr.mxu0 0.0
    %550 = vmatpush1.msra.mxu0 0.0
    %551 = vmatprep.subr.mxu0 0.0
    %552 = vmatpush1.msra.mxu0 0.0
    %553 = vmatprep.subr.mxu0 0.0
    %554 = vmatpush1.msra.mxu0 0.0
    %555 = vmatprep.subr.mxu0 0.0
    %556 = vmatpush1.msra.mxu0 0.0
    %557 = vmatprep.subr.mxu0 0.0
    %558 = vmatpush1.msra.mxu0 0.0
    %559 = vmatprep.subr.mxu0 0.0
    %560 = vmatpush1.msra.mxu0 0.0
    %561 = vmatprep.mubr.f32.mxu0 0.0
    %562 = vmatmul.mubr.f32.gmra.mrb[0].mxu0 %v492
    %v563 = vpop.f32.mrb[0].mxu0
    %v564 = vadd.f32 0.0, %v563
    %v565 = vpop.f32.mrb[0].mxu0
    %566 = vmatprep.mubr.f32.mxu0 0.0
    %567 = vmatmul.mubr.f32.gmra.mrb[0].mxu0 %v495
    %v568 = vpop.f32.mrb[0].mxu0
    %v569 = vadd.f32 0.0, %v568
    %v570 = vpop.f32.mrb[0].mxu0
    %571 = vdwg.mxu0
    %574 = vrot.lane.b32.xlu0 %v564, 8
    %v575 = vpop.permute.xlu0 %574
    %576 = vrot.lane.b32.xlu0 %v569, 8
    %v577 = vpop.permute.xlu0 %576
    %vm580 = vcmask 130112
    %581 = vst.msk [vmem:[#allocation2] sm:$0xff] %vm580, %v575
    %582 = vst.msk [vmem:[#allocation2 + $0x8] sm:$0xff] %vm580, %v577
    %583 = vrot.lane.b32.xlu0 %v134, 112
    %v584 = vpop.permute.xlu0 %583
    %585 = vrot.lane.b32.xlu0 %v139, 112
    %v586 = vpop.permute.xlu0 %585
    %587 = vrot.lane.b32.xlu0 %v134, 80
    %v588 = vpop.permute.xlu0 %587
    %589 = vrot.lane.b32.xlu0 %v139, 80
    %v590 = vpop.permute.xlu0 %589
    %v591 = vsel %vm162, %v584, 0
    %v593 = vsel %vm162, %v586, 0
    %v595 = vsel %vm162, %v588, 0
    %v597 = vsel %vm162, %v590, 0
    %599 = vmatprep.subr.mxu0 0.0
    %600 = vmatpush1.xpose.msra.mxu0 %v595
    %601 = vmatprep.subr.mxu0 0.0
    %602 = vmatpush1.xpose.msra.mxu0 %v597
    %603 = vmatprep.subr.mxu0 0.0
    %604 = vmatpush1.xpose.msra.mxu0 0.0
    %605 = vmatprep.subr.mxu0 0.0
    %606 = vmatpush1.xpose.msra.mxu0 0.0
    %607 = vmatprep.subr.mxu0 0.0
    %608 = vmatpush1.xpose.msra.mxu0 0.0
    %609 = vmatprep.subr.mxu0 0.0
    %610 = vmatpush1.xpose.msra.mxu0 0.0
    %611 = vmatprep.subr.mxu0 0.0
    %612 = vmatpush1.xpose.msra.mxu0 0.0
    %613 = vmatprep.subr.mxu0 0.0
    %614 = vmatpush1.xpose.msra.mxu0 0.0
    %615 = vmatprep.subr.mxu0 0.0
    %616 = vmatpush1.xpose.msra.mxu0 0.0
    %617 = vmatprep.subr.mxu0 0.0
    %618 = vmatpush1.xpose.msra.mxu0 0.0
    %619 = vmatprep.subr.mxu0 0.0
    %620 = vmatpush1.xpose.msra.mxu0 0.0
    %621 = vmatprep.subr.mxu0 0.0
    %622 = vmatpush1.xpose.msra.mxu0 0.0
    %623 = vmatprep.subr.mxu0 0.0
    %624 = vmatpush1.xpose.msra.mxu0 0.0
    %625 = vmatprep.subr.mxu0 0.0
    %626 = vmatpush1.xpose.msra.mxu0 0.0
    %627 = vmatprep.subr.mxu0 0.0
    %628 = vmatpush1.xpose.msra.mxu0 0.0
    %629 = vmatprep.subr.mxu0 0.0
    %630 = vmatpush1.xpose.msra.mxu0 0.0
    %631 = vmatprep.subr.mxu0 0.0
    %632 = vmatpush1.xpose.msra.mxu0 0.0
    %633 = vmatprep.subr.mxu0 0.0
    %634 = vmatpush1.xpose.msra.mxu0 0.0
    %635 = vmatprep.subr.mxu0 0.0
    %636 = vmatpush1.xpose.msra.mxu0 0.0
    %637 = vmatprep.subr.mxu0 0.0
    %638 = vmatpush1.xpose.msra.mxu0 0.0
    %639 = vmatprep.subr.mxu0 0.0
    %640 = vmatpush1.xpose.msra.mxu0 0.0
    %641 = vmatprep.subr.mxu0 0.0
    %642 = vmatpush1.xpose.msra.mxu0 0.0
    %643 = vmatprep.subr.mxu0 0.0
    %644 = vmatpush1.xpose.msra.mxu0 0.0
    %645 = vmatprep.subr.mxu0 0.0
    %646 = vmatpush1.xpose.msra.mxu0 0.0
    %647 = vmatprep.subr.mxu0 0.0
    %648 = vmatpush1.xpose.msra.mxu0 0.0
    %649 = vmatprep.subr.mxu0 0.0
    %650 = vmatpush1.xpose.msra.mxu0 0.0
    %651 = vmatprep.subr.mxu0 0.0
    %652 = vmatpush1.xpose.msra.mxu0 0.0
    %653 = vmatprep.subr.mxu0 0.0
    %654 = vmatpush1.xpose.msra.mxu0 0.0
    %655 = vmatprep.subr.mxu0 0.0
    %656 = vmatpush1.xpose.msra.mxu0 0.0
    %657 = vmatprep.subr.mxu0 0.0
    %658 = vmatpush1.xpose.msra.mxu0 0.0
    %659 = vmatprep.subr.mxu0 0.0
    %660 = vmatpush1.xpose.msra.mxu0 0.0
    %661 = vmatprep.subr.mxu0 0.0
    %662 = vmatpush1.xpose.msra.mxu0 0.0
    %663 = vmatprep.mubr.f32.mxu0 0.0
    %664 = vmatmul.mubr.f32.gmra.mrb[0].mxu0 %v591
    %v665 = vpop.f32.mrb[0].mxu0
    %v666 = vadd.f32 0.0, %v665
    %v667 = vpop.f32.mrb[0].mxu0
    %668 = vmatprep.mubr.f32.mxu0 0.0
    %669 = vmatmul.mubr.f32.gmra.mrb[0].mxu0 %v593
    %v670 = vpop.f32.mrb[0].mxu0
    %v671 = vadd.f32 0.0, %v670
    %v672 = vpop.f32.mrb[0].mxu0
    %673 = vdwg.mxu0
    %v674 = vmul.f32 %v666, 0.35355338
    %v675 = vmul.f32 %v671, 0.35355338
    %v676 = vadd.f32 %v674, %v252
    %v677 = vadd.f32 %v675, %v252
    %v678 = vsel %vm256, %v676, -inf
    %679 = vmax.xlane.f32.xlu0 %v678
    %v680 = vpop.xlane.xlu0 %679
    %v681 = vsel %vm256, %v677, -inf
    %682 = vmax.xlane.f32.xlu0 %v681
    %v683 = vpop.xlane.xlu0 %682
    %v684 = vsub.f32 %v676, %v680
    %v685 = vsub.f32 %v677, %v683
    %v686 = vmul.f32 %v684, 1.442695
    %v687 = vpow.pop %v686
    %v688 = vmul.f32 %v685, 1.442695
    %v689 = vpow.pop %v688
    %v690 = vsel %vm256, %v687, 0.0
    %691 = vadd.xlane.f32.xlu0 %v690
    %v692 = vpop.xlane.xlu0 %691
    %v693 = vsel %vm256, %v689, 0.0
    %694 = vadd.xlane.f32.xlu0 %v693
    %v695 = vpop.xlane.xlu0 %694
    %v696 = vrcp.pop %v692
    %v697 = vrcp.pop %v695
    %v698 = vmul.f32 %v687, %v696
    %v699 = vmul.f32 %v689, %v697
    %700 = vrot.lane.b32.xlu0 %v134, 48
    %v701 = vpop.permute.xlu0 %700
    %702 = vrot.lane.b32.xlu0 %v139, 48
    %v703 = vpop.permute.xlu0 %702
    %v707 = vsel %vm256, %v698, 0
    %v710 = vsel %vm256, %v699, 0
    %712 = vmatprep.subr.mxu0 0.0
    %713 = vmatpush1.msra.mxu0 %v701
    %714 = vmatprep.subr.mxu0 0.0
    %715 = vmatpush1.msra.mxu0 %v703
    %716 = vmatprep.subr.mxu0 0.0
    %717 = vmatpush1.msra.mxu0 0.0
    %718 = vmatprep.subr.mxu0 0.0
    %719 = vmatpush1.msra.mxu0 0.0
    %720 = vmatprep.subr.mxu0 0.0
    %721 = vmatpush1.msra.mxu0 0.0
    %722 = vmatprep.subr.mxu0 0.0
    %723 = vmatpush1.msra.mxu0 0.0
    %724 = vmatprep.subr.mxu0 0.0
    %725 = vmatpush1.msra.mxu0 0.0
    %726 = vmatprep.subr.mxu0 0.0
    %727 = vmatpush1.msra.mxu0 0.0
    %728 = vmatprep.subr.mxu0 0.0
    %729 = vmatpush1.msra.mxu0 0.0
    %730 = vmatprep.subr.mxu0 0.0
    %731 = vmatpush1.msra.mxu0 0.0
    %732 = vmatprep.subr.mxu0 0.0
    %733 = vmatpush1.msra.mxu0 0.0
    %734 = vmatprep.subr.mxu0 0.0
    %735 = vmatpush1.msra.mxu0 0.0
    %736 = vmatprep.subr.mxu0 0.0
    %737 = vmatpush1.msra.mxu0 0.0
    %738 = vmatprep.subr.mxu0 0.0
    %739 = vmatpush1.msra.mxu0 0.0
    %740 = vmatprep.subr.mxu0 0.0
    %741 = vmatpush1.msra.mxu0 0.0
    %742 = vmatprep.subr.mxu0 0.0
    %743 = vmatpush1.msra.mxu0 0.0
    %744 = vmatprep.subr.mxu0 0.0
    %745 = vmatpush1.msra.mxu0 0.0
    %746 = vmatprep.subr.mxu0 0.0
    %747 = vmatpush1.msra.mxu0 0.0
    %748 = vmatprep.subr.mxu0 0.0
    %749 = vmatpush1.msra.mxu0 0.0
    %750 = vmatprep.subr.mxu0 0.0
    %751 = vmatpush1.msra.mxu0 0.0
    %752 = vmatprep.subr.mxu0 0.0
    %753 = vmatpush1.msra.mxu0 0.0
    %754 = vmatprep.subr.mxu0 0.0
    %755 = vmatpush1.msra.mxu0 0.0
    %756 = vmatprep.subr.mxu0 0.0
    %757 = vmatpush1.msra.mxu0 0.0
    %758 = vmatprep.subr.mxu0 0.0
    %759 = vmatpush1.msra.mxu0 0.0
    %760 = vmatprep.subr.mxu0 0.0
    %761 = vmatpush1.msra.mxu0 0.0
    %762 = vmatprep.subr.mxu0 0.0
    %763 = vmatpush1.msra.mxu0 0.0
    %764 = vmatprep.subr.mxu0 0.0
    %765 = vmatpush1.msra.mxu0 0.0
    %766 = vmatprep.subr.mxu0 0.0
    %767 = vmatpush1.msra.mxu0 0.0
    %768 = vmatprep.subr.mxu0 0.0
    %769 = vmatpush1.msra.mxu0 0.0
    %770 = vmatprep.subr.mxu0 0.0
    %771 = vmatpush1.msra.mxu0 0.0
    %772 = vmatprep.subr.mxu0 0.0
    %773 = vmatpush1.msra.mxu0 0.0
    %774 = vmatprep.subr.mxu0 0.0
    %775 = vmatpush1.msra.mxu0 0.0
    %776 = vmatprep.mubr.f32.mxu0 0.0
    %777 = vmatmul.mubr.f32.gmra.mrb[0].mxu0 %v707
    %v778 = vpop.f32.mrb[0].mxu0
    %v779 = vadd.f32 0.0, %v778
    %v780 = vpop.f32.mrb[0].mxu0
    %781 = vmatprep.mubr.f32.mxu0 0.0
    %782 = vmatmul.mubr.f32.gmra.mrb[0].mxu0 %v710
    %v783 = vpop.f32.mrb[0].mxu0
    %v784 = vadd.f32 0.0, %v783
    %v785 = vpop.f32.mrb[0].mxu0
    %786 = vdwg.mxu0
    %789 = vrot.lane.b32.xlu0 %v779, 16
    %v790 = vpop.permute.xlu0 %789
    %791 = vrot.lane.b32.xlu0 %v784, 16
    %v792 = vpop.permute.xlu0 %791
    %vm795 = vcmask 195712
    %796 = vst.msk [vmem:[#allocation2] sm:$0xff] %vm795, %v790
    %797 = vst.msk [vmem:[#allocation2 + $0x8] sm:$0xff] %vm795, %v792
    %798 = vrot.lane.b32.xlu0 %v134, 104
    %v799 = vpop.permute.xlu0 %798
    %800 = vrot.lane.b32.xlu0 %v139, 104
    %v801 = vpop.permute.xlu0 %800
    %802 = vrot.lane.b32.xlu0 %v134, 72
    %v803 = vpop.permute.xlu0 %802
    %804 = vrot.lane.b32.xlu0 %v139, 72
    %v805 = vpop.permute.xlu0 %804
    %v806 = vsel %vm162, %v799, 0
    %v808 = vsel %vm162, %v801, 0
    %v810 = vsel %vm162, %v803, 0
    %v812 = vsel %vm162, %v805, 0
    %814 = vmatprep.subr.mxu0 0.0
    %815 = vmatpush1.xpose.msra.mxu0 %v810
    %816 = vmatprep.subr.mxu0 0.0
    %817 = vmatpush1.xpose.msra.mxu0 %v812
    %818 = vmatprep.subr.mxu0 0.0
    %819 = vmatpush1.xpose.msra.mxu0 0.0
    %820 = vmatprep.subr.mxu0 0.0
    %821 = vmatpush1.xpose.msra.mxu0 0.0
    %822 = vmatprep.subr.mxu0 0.0
    %823 = vmatpush1.xpose.msra.mxu0 0.0
    %824 = vmatprep.subr.mxu0 0.0
    %825 = vmatpush1.xpose.msra.mxu0 0.0
    %826 = vmatprep.subr.mxu0 0.0
    %827 = vmatpush1.xpose.msra.mxu0 0.0
    %828 = vmatprep.subr.mxu0 0.0
    %829 = vmatpush1.xpose.msra.mxu0 0.0
    %830 = vmatprep.subr.mxu0 0.0
    %831 = vmatpush1.xpose.msra.mxu0 0.0
    %832 = vmatprep.subr.mxu0 0.0
    %833 = vmatpush1.xpose.msra.mxu0 0.0
    %834 = vmatprep.subr.mxu0 0.0
    %835 = vmatpush1.xpose.msra.mxu0 0.0
    %836 = vmatprep.subr.mxu0 0.0
    %837 = vmatpush1.xpose.msra.mxu0 0.0
    %838 = vmatprep.subr.mxu0 0.0
    %839 = vmatpush1.xpose.msra.mxu0 0.0
    %840 = vmatprep.subr.mxu0 0.0
    %841 = vmatpush1.xpose.msra.mxu0 0.0
    %842 = vmatprep.subr.mxu0 0.0
    %843 = vmatpush1.xpose.msra.mxu0 0.0
    %844 = vmatprep.subr.mxu0 0.0
    %845 = vmatpush1.xpose.msra.mxu0 0.0
    %846 = vmatprep.subr.mxu0 0.0
    %847 = vmatpush1.xpose.msra.mxu0 0.0
    %848 = vmatprep.subr.mxu0 0.0
    %849 = vmatpush1.xpose.msra.mxu0 0.0
    %850 = vmatprep.subr.mxu0 0.0
    %851 = vmatpush1.xpose.msra.mxu0 0.0
    %852 = vmatprep.subr.mxu0 0.0
    %853 = vmatpush1.xpose.msra.mxu0 0.0
    %854 = vmatprep.subr.mxu0 0.0
    %855 = vmatpush1.xpose.msra.mxu0 0.0
    %856 = vmatprep.subr.mxu0 0.0
    %857 = vmatpush1.xpose.msra.mxu0 0.0
    %858 = vmatprep.subr.mxu0 0.0
    %859 = vmatpush1.xpose.msra.mxu0 0.0
    %860 = vmatprep.subr.mxu0 0.0
    %861 = vmatpush1.xpose.msra.mxu0 0.0
    %862 = vmatprep.subr.mxu0 0.0
    %863 = vmatpush1.xpose.msra.mxu0 0.0
    %864 = vmatprep.subr.mxu0 0.0
    %865 = vmatpush1.xpose.msra.mxu0 0.0
    %866 = vmatprep.subr.mxu0 0.0
    %867 = vmatpush1.xpose.msra.mxu0 0.0
    %868 = vmatprep.subr.mxu0 0.0
    %869 = vmatpush1.xpose.msra.mxu0 0.0
    %870 = vmatprep.subr.mxu0 0.0
    %871 = vmatpush1.xpose.msra.mxu0 0.0
    %872 = vmatprep.subr.mxu0 0.0
    %873 = vmatpush1.xpose.msra.mxu0 0.0
    %874 = vmatprep.subr.mxu0 0.0
    %875 = vmatpush1.xpose.msra.mxu0 0.0
    %876 = vmatprep.subr.mxu0 0.0
    %877 = vmatpush1.xpose.msra.mxu0 0.0
    %878 = vmatprep.mubr.f32.mxu0 0.0
    %879 = vmatmul.mubr.f32.gmra.mrb[0].mxu0 %v806
    %v880 = vpop.f32.mrb[0].mxu0
    %v881 = vadd.f32 0.0, %v880
    %v882 = vpop.f32.mrb[0].mxu0
    %883 = vmatprep.mubr.f32.mxu0 0.0
    %884 = vmatmul.mubr.f32.gmra.mrb[0].mxu0 %v808
    %v885 = vpop.f32.mrb[0].mxu0
    %v886 = vadd.f32 0.0, %v885
    %v887 = vpop.f32.mrb[0].mxu0
    %888 = vdwg.mxu0
    %v889 = vmul.f32 %v881, 0.35355338
    %v890 = vmul.f32 %v886, 0.35355338
    %v891 = vadd.f32 %v889, %v252
    %v892 = vadd.f32 %v890, %v252
    %v893 = vsel %vm256, %v891, -inf
    %894 = vmax.xlane.f32.xlu0 %v893
    %v895 = vpop.xlane.xlu0 %894
    %v896 = vsel %vm256, %v892, -inf
    %897 = vmax.xlane.f32.xlu0 %v896
    %v898 = vpop.xlane.xlu0 %897
    %v899 = vsub.f32 %v891, %v895
    %v900 = vsub.f32 %v892, %v898
    %v901 = vmul.f32 %v899, 1.442695
    %v902 = vpow.pop %v901
    %v903 = vmul.f32 %v900, 1.442695
    %v904 = vpow.pop %v903
    %v905 = vsel %vm256, %v902, 0.0
    %906 = vadd.xlane.f32.xlu0 %v905
    %v907 = vpop.xlane.xlu0 %906
    %v908 = vsel %vm256, %v904, 0.0
    %909 = vadd.xlane.f32.xlu0 %v908
    %v910 = vpop.xlane.xlu0 %909
    %v911 = vrcp.pop %v907
    %v912 = vrcp.pop %v910
    %v913 = vmul.f32 %v902, %v911
    %v914 = vmul.f32 %v904, %v912
    %915 = vrot.lane.b32.xlu0 %v134, 40
    %v916 = vpop.permute.xlu0 %915
    %917 = vrot.lane.b32.xlu0 %v139, 40
    %v918 = vpop.permute.xlu0 %917
    %v922 = vsel %vm256, %v913, 0
    %v925 = vsel %vm256, %v914, 0
    %927 = vmatprep.subr.mxu0 0.0
    %928 = vmatpush1.msra.mxu0 %v916
    %929 = vmatprep.subr.mxu0 0.0
    %930 = vmatpush1.msra.mxu0 %v918
    %931 = vmatprep.subr.mxu0 0.0
    %932 = vmatpush1.msra.mxu0 0.0
    %933 = vmatprep.subr.mxu0 0.0
    %934 = vmatpush1.msra.mxu0 0.0
    %935 = vmatprep.subr.mxu0 0.0
    %936 = vmatpush1.msra.mxu0 0.0
    %937 = vmatprep.subr.mxu0 0.0
    %938 = vmatpush1.msra.mxu0 0.0
    %939 = vmatprep.subr.mxu0 0.0
    %940 = vmatpush1.msra.mxu0 0.0
    %941 = vmatprep.subr.mxu0 0.0
    %942 = vmatpush1.msra.mxu0 0.0
    %943 = vmatprep.subr.mxu0 0.0
    %944 = vmatpush1.msra.mxu0 0.0
    %945 = vmatprep.subr.mxu0 0.0
    %946 = vmatpush1.msra.mxu0 0.0
    %947 = vmatprep.subr.mxu0 0.0
    %948 = vmatpush1.msra.mxu0 0.0
    %949 = vmatprep.subr.mxu0 0.0
    %950 = vmatpush1.msra.mxu0 0.0
    %951 = vmatprep.subr.mxu0 0.0
    %952 = vmatpush1.msra.mxu0 0.0
    %953 = vmatprep.subr.mxu0 0.0
    %954 = vmatpush1.msra.mxu0 0.0
    %955 = vmatprep.subr.mxu0 0.0
    %956 = vmatpush1.msra.mxu0 0.0
    %957 = vmatprep.subr.mxu0 0.0
    %958 = vmatpush1.msra.mxu0 0.0
    %959 = vmatprep.subr.mxu0 0.0
    %960 = vmatpush1.msra.mxu0 0.0
    %961 = vmatprep.subr.mxu0 0.0
    %962 = vmatpush1.msra.mxu0 0.0
    %963 = vmatprep.subr.mxu0 0.0
    %964 = vmatpush1.msra.mxu0 0.0
    %965 = vmatprep.subr.mxu0 0.0
    %966 = vmatpush1.msra.mxu0 0.0
    %967 = vmatprep.subr.mxu0 0.0
    %968 = vmatpush1.msra.mxu0 0.0
    %969 = vmatprep.subr.mxu0 0.0
    %970 = vmatpush1.msra.mxu0 0.0
    %971 = vmatprep.subr.mxu0 0.0
    %972 = vmatpush1.msra.mxu0 0.0
    %973 = vmatprep.subr.mxu0 0.0
    %974 = vmatpush1.msra.mxu0 0.0
    %975 = vmatprep.subr.mxu0 0.0
    %976 = vmatpush1.msra.mxu0 0.0
    %977 = vmatprep.subr.mxu0 0.0
    %978 = vmatpush1.msra.mxu0 0.0
    %979 = vmatprep.subr.mxu0 0.0
    %980 = vmatpush1.msra.mxu0 0.0
    %981 = vmatprep.subr.mxu0 0.0
    %982 = vmatpush1.msra.mxu0 0.0
    %983 = vmatprep.subr.mxu0 0.0
    %984 = vmatpush1.msra.mxu0 0.0
    %985 = vmatprep.subr.mxu0 0.0
    %986 = vmatpush1.msra.mxu0 0.0
    %987 = vmatprep.subr.mxu0 0.0
    %988 = vmatpush1.msra.mxu0 0.0
    %989 = vmatprep.subr.mxu0 0.0
    %990 = vmatpush1.msra.mxu0 0.0
    %991 = vmatprep.mubr.f32.mxu0 0.0
    %992 = vmatmul.mubr.f32.gmra.mrb[0].mxu0 %v922
    %v993 = vpop.f32.mrb[0].mxu0
    %v994 = vadd.f32 0.0, %v993
    %v995 = vpop.f32.mrb[0].mxu0
    %996 = vmatprep.mubr.f32.mxu0 0.0
    %997 = vmatmul.mubr.f32.gmra.mrb[0].mxu0 %v925
    %v998 = vpop.f32.mrb[0].mxu0
    %v999 = vadd.f32 0.0, %v998
    %v1000 = vpop.f32.mrb[0].mxu0
    %1001 = vdwg.mxu0
    %1004 = vrot.lane.b32.xlu0 %v994, 24
    %v1005 = vpop.permute.xlu0 %1004
    %1006 = vrot.lane.b32.xlu0 %v999, 24
    %v1007 = vpop.permute.xlu0 %1006
    %vm1010 = vcmask 261312
    %1011 = vst.msk [vmem:[#allocation2] sm:$0xff] %vm1010, %v1005
    %1012 = vst.msk [vmem:[#allocation2 + $0x8] sm:$0xff] %vm1010, %v1007
    %vm1013 = vcmp.eq.f32.partialorder %v153, 0.0
    %v1014 = vsel %vm1013, -1e+10, 0.0
    %1017 = vrot.lane.b32.xlu0 %v144, 96
    %v1018 = vpop.permute.xlu0 %1017
    %1019 = vrot.lane.b32.xlu0 %v149, 96
    %v1020 = vpop.permute.xlu0 %1019
    %v1021 = vsel %vm162, %v144, 0
    %v1023 = vsel %vm162, %v149, 0
    %v1025 = vsel %vm162, %v1018, 0
    %v1027 = vsel %vm162, %v1020, 0
    %1029 = vmatprep.subr.mxu0 0.0
    %1030 = vmatpush1.xpose.msra.mxu0 %v1025
    %1031 = vmatprep.subr.mxu0 0.0
    %1032 = vmatpush1.xpose.msra.mxu0 %v1027
    %1033 = vmatprep.subr.mxu0 0.0
    %1034 = vmatpush1.xpose.msra.mxu0 0.0
    %1035 = vmatprep.subr.mxu0 0.0
    %1036 = vmatpush1.xpose.msra.mxu0 0.0
    %1037 = vmatprep.subr.mxu0 0.0
    %1038 = vmatpush1.xpose.msra.mxu0 0.0
    %1039 = vmatprep.subr.mxu0 0.0
    %1040 = vmatpush1.xpose.msra.mxu0 0.0
    %1041 = vmatprep.subr.mxu0 0.0
    %1042 = vmatpush1.xpose.msra.mxu0 0.0
    %1043 = vmatprep.subr.mxu0 0.0
    %1044 = vmatpush1.xpose.msra.mxu0 0.0
    %1045 = vmatprep.subr.mxu0 0.0
    %1046 = vmatpush1.xpose.msra.mxu0 0.0
    %1047 = vmatprep.subr.mxu0 0.0
    %1048 = vmatpush1.xpose.msra.mxu0 0.0
    %1049 = vmatprep.subr.mxu0 0.0
    %1050 = vmatpush1.xpose.msra.mxu0 0.0
    %1051 = vmatprep.subr.mxu0 0.0
    %1052 = vmatpush1.xpose.msra.mxu0 0.0
    %1053 = vmatprep.subr.mxu0 0.0
    %1054 = vmatpush1.xpose.msra.mxu0 0.0
    %1055 = vmatprep.subr.mxu0 0.0
    %1056 = vmatpush1.xpose.msra.mxu0 0.0
    %1057 = vmatprep.subr.mxu0 0.0
    %1058 = vmatpush1.xpose.msra.mxu0 0.0
    %1059 = vmatprep.subr.mxu0 0.0
    %1060 = vmatpush1.xpose.msra.mxu0 0.0
    %1061 = vmatprep.subr.mxu0 0.0
    %1062 = vmatpush1.xpose.msra.mxu0 0.0
    %1063 = vmatprep.subr.mxu0 0.0
    %1064 = vmatpush1.xpose.msra.mxu0 0.0
    %1065 = vmatprep.subr.mxu0 0.0
    %1066 = vmatpush1.xpose.msra.mxu0 0.0
    %1067 = vmatprep.subr.mxu0 0.0
    %1068 = vmatpush1.xpose.msra.mxu0 0.0
    %1069 = vmatprep.subr.mxu0 0.0
    %1070 = vmatpush1.xpose.msra.mxu0 0.0
    %1071 = vmatprep.subr.mxu0 0.0
    %1072 = vmatpush1.xpose.msra.mxu0 0.0
    %1073 = vmatprep.subr.mxu0 0.0
    %1074 = vmatpush1.xpose.msra.mxu0 0.0
    %1075 = vmatprep.subr.mxu0 0.0
    %1076 = vmatpush1.xpose.msra.mxu0 0.0
    %1077 = vmatprep.subr.mxu0 0.0
    %1078 = vmatpush1.xpose.msra.mxu0 0.0
    %1079 = vmatprep.subr.mxu0 0.0
    %1080 = vmatpush1.xpose.msra.mxu0 0.0
    %1081 = vmatprep.subr.mxu0 0.0
    %1082 = vmatpush1.xpose.msra.mxu0 0.0
    %1083 = vmatprep.subr.mxu0 0.0
    %1084 = vmatpush1.xpose.msra.mxu0 0.0
    %1085 = vmatprep.subr.mxu0 0.0
    %1086 = vmatpush1.xpose.msra.mxu0 0.0
    %1087 = vmatprep.subr.mxu0 0.0
    %1088 = vmatpush1.xpose.msra.mxu0 0.0
    %1089 = vmatprep.subr.mxu0 0.0
    %1090 = vmatpush1.xpose.msra.mxu0 0.0
    %1091 = vmatprep.subr.mxu0 0.0
    %1092 = vmatpush1.xpose.msra.mxu0 0.0
    %1093 = vmatprep.mubr.f32.mxu0 0.0
    %1094 = vmatmul.mubr.f32.gmra.mrb[0].mxu0 %v1021
    %v1095 = vpop.f32.mrb[0].mxu0
    %v1096 = vadd.f32 0.0, %v1095
    %v1097 = vpop.f32.mrb[0].mxu0
    %1098 = vmatprep.mubr.f32.mxu0 0.0
    %1099 = vmatmul.mubr.f32.gmra.mrb[0].mxu0 %v1023
    %v1100 = vpop.f32.mrb[0].mxu0
    %v1101 = vadd.f32 0.0, %v1100
    %v1102 = vpop.f32.mrb[0].mxu0
    %1103 = vdwg.mxu0
    %v1104 = vmul.f32 %v1096, 0.35355338
    %v1105 = vmul.f32 %v1101, 0.35355338
    %v1107 = vlaneseq
    %v1108 = vshrl.u32 %v1107, 7
    %v1109 = vsub.s32 0, %v1108
    %v1110 = vrot.slane %v1014, %v1109
    %v1112 = vadd.f32 %v1104, %v1110
    %v1113 = vadd.f32 %v1105, %v1110
    %v1114 = vsel %vm256, %v1112, -inf
    %1115 = vmax.xlane.f32.xlu0 %v1114
    %v1116 = vpop.xlane.xlu0 %1115
    %v1117 = vsel %vm256, %v1113, -inf
    %1118 = vmax.xlane.f32.xlu0 %v1117
    %v1119 = vpop.xlane.xlu0 %1118
    %v1120 = vsub.f32 %v1112, %v1116
    %v1121 = vsub.f32 %v1113, %v1119
    %v1122 = vmul.f32 %v1120, 1.442695
    %v1123 = vpow.pop %v1122
    %v1124 = vmul.f32 %v1121, 1.442695
    %v1125 = vpow.pop %v1124
    %v1126 = vsel %vm256, %v1123, 0.0
    %1127 = vadd.xlane.f32.xlu0 %v1126
    %v1128 = vpop.xlane.xlu0 %1127
    %v1129 = vsel %vm256, %v1125, 0.0
    %1130 = vadd.xlane.f32.xlu0 %v1129
    %v1131 = vpop.xlane.xlu0 %1130
    %v1132 = vrcp.pop %v1128
    %v1133 = vrcp.pop %v1131
    %v1134 = vmul.f32 %v1123, %v1132
    %v1135 = vmul.f32 %v1125, %v1133
    %1136 = vrot.lane.b32.xlu0 %v144, 64
    %v1137 = vpop.permute.xlu0 %1136
    %1138 = vrot.lane.b32.xlu0 %v149, 64
    %v1139 = vpop.permute.xlu0 %1138
    %v1143 = vsel %vm256, %v1134, 0
    %v1146 = vsel %vm256, %v1135, 0
    %1148 = vmatprep.subr.mxu0 0.0
    %1149 = vmatpush1.msra.mxu0 %v1137
    %1150 = vmatprep.subr.mxu0 0.0
    %1151 = vmatpush1.msra.mxu0 %v1139
    %1152 = vmatprep.subr.mxu0 0.0
    %1153 = vmatpush1.msra.mxu0 0.0
    %1154 = vmatprep.subr.mxu0 0.0
    %1155 = vmatpush1.msra.mxu0 0.0
    %1156 = vmatprep.subr.mxu0 0.0
    %1157 = vmatpush1.msra.mxu0 0.0
    %1158 = vmatprep.subr.mxu0 0.0
    %1159 = vmatpush1.msra.mxu0 0.0
    %1160 = vmatprep.subr.mxu0 0.0
    %1161 = vmatpush1.msra.mxu0 0.0
    %1162 = vmatprep.subr.mxu0 0.0
    %1163 = vmatpush1.msra.mxu0 0.0
    %1164 = vmatprep.subr.mxu0 0.0
    %1165 = vmatpush1.msra.mxu0 0.0
    %1166 = vmatprep.subr.mxu0 0.0
    %1167 = vmatpush1.msra.mxu0 0.0
    %1168 = vmatprep.subr.mxu0 0.0
    %1169 = vmatpush1.msra.mxu0 0.0
    %1170 = vmatprep.subr.mxu0 0.0
    %1171 = vmatpush1.msra.mxu0 0.0
    %1172 = vmatprep.subr.mxu0 0.0
    %1173 = vmatpush1.msra.mxu0 0.0
    %1174 = vmatprep.subr.mxu0 0.0
    %1175 = vmatpush1.msra.mxu0 0.0
    %1176 = vmatprep.subr.mxu0 0.0
    %1177 = vmatpush1.msra.mxu0 0.0
    %1178 = vmatprep.subr.mxu0 0.0
    %1179 = vmatpush1.msra.mxu0 0.0
    %1180 = vmatprep.subr.mxu0 0.0
    %1181 = vmatpush1.msra.mxu0 0.0
    %1182 = vmatprep.subr.mxu0 0.0
    %1183 = vmatpush1.msra.mxu0 0.0
    %1184 = vmatprep.subr.mxu0 0.0
    %1185 = vmatpush1.msra.mxu0 0.0
    %1186 = vmatprep.subr.mxu0 0.0
    %1187 = vmatpush1.msra.mxu0 0.0
    %1188 = vmatprep.subr.mxu0 0.0
    %1189 = vmatpush1.msra.mxu0 0.0
    %1190 = vmatprep.subr.mxu0 0.0
    %1191 = vmatpush1.msra.mxu0 0.0
    %1192 = vmatprep.subr.mxu0 0.0
    %1193 = vmatpush1.msra.mxu0 0.0
    %1194 = vmatprep.subr.mxu0 0.0
    %1195 = vmatpush1.msra.mxu0 0.0
    %1196 = vmatprep.subr.mxu0 0.0
    %1197 = vmatpush1.msra.mxu0 0.0
    %1198 = vmatprep.subr.mxu0 0.0
    %1199 = vmatpush1.msra.mxu0 0.0
    %1200 = vmatprep.subr.mxu0 0.0
    %1201 = vmatpush1.msra.mxu0 0.0
    %1202 = vmatprep.subr.mxu0 0.0
    %1203 = vmatpush1.msra.mxu0 0.0
    %1204 = vmatprep.subr.mxu0 0.0
    %1205 = vmatpush1.msra.mxu0 0.0
    %1206 = vmatprep.subr.mxu0 0.0
    %1207 = vmatpush1.msra.mxu0 0.0
    %1208 = vmatprep.subr.mxu0 0.0
    %1209 = vmatpush1.msra.mxu0 0.0
    %1210 = vmatprep.subr.mxu0 0.0
    %1211 = vmatpush1.msra.mxu0 0.0
    %1212 = vmatprep.mubr.f32.mxu0 0.0
    %1213 = vmatmul.mubr.f32.gmra.mrb[0].mxu0 %v1143
    %v1214 = vpop.f32.mrb[0].mxu0
    %v1215 = vadd.f32 0.0, %v1214
    %v1216 = vpop.f32.mrb[0].mxu0
    %1217 = vmatprep.mubr.f32.mxu0 0.0
    %1218 = vmatmul.mubr.f32.gmra.mrb[0].mxu0 %v1146
    %v1219 = vpop.f32.mrb[0].mxu0
    %v1220 = vadd.f32 0.0, %v1219
    %v1221 = vpop.f32.mrb[0].mxu0
    %1222 = vdwg.mxu0
    %1223 = vst.msk [vmem:[#allocation2 + $0x10] sm:$0xff] %vm162, %v1215
    %1224 = vst.msk [vmem:[#allocation2 + $0x18] sm:$0xff] %vm162, %v1220
    %1225 = vrot.lane.b32.xlu0 %v144, 120
    %v1226 = vpop.permute.xlu0 %1225
    %1227 = vrot.lane.b32.xlu0 %v149, 120
    %v1228 = vpop.permute.xlu0 %1227
    %1229 = vrot.lane.b32.xlu0 %v144, 88
    %v1230 = vpop.permute.xlu0 %1229
    %1231 = vrot.lane.b32.xlu0 %v149, 88
    %v1232 = vpop.permute.xlu0 %1231
    %v1233 = vsel %vm162, %v1226, 0
    %v1235 = vsel %vm162, %v1228, 0
    %v1237 = vsel %vm162, %v1230, 0
    %v1239 = vsel %vm162, %v1232, 0
    %1241 = vmatprep.subr.mxu0 0.0
    %1242 = vmatpush1.xpose.msra.mxu0 %v1237
    %1243 = vmatprep.subr.mxu0 0.0
    %1244 = vmatpush1.xpose.msra.mxu0 %v1239
    %1245 = vmatprep.subr.mxu0 0.0
    %1246 = vmatpush1.xpose.msra.mxu0 0.0
    %1247 = vmatprep.subr.mxu0 0.0
    %1248 = vmatpush1.xpose.msra.mxu0 0.0
    %1249 = vmatprep.subr.mxu0 0.0
    %1250 = vmatpush1.xpose.msra.mxu0 0.0
    %1251 = vmatprep.subr.mxu0 0.0
    %1252 = vmatpush1.xpose.msra.mxu0 0.0
    %1253 = vmatprep.subr.mxu0 0.0
    %1254 = vmatpush1.xpose.msra.mxu0 0.0
    %1255 = vmatprep.subr.mxu0 0.0
    %1256 = vmatpush1.xpose.msra.mxu0 0.0
    %1257 = vmatprep.subr.mxu0 0.0
    %1258 = vmatpush1.xpose.msra.mxu0 0.0
    %1259 = vmatprep.subr.mxu0 0.0
    %1260 = vmatpush1.xpose.msra.mxu0 0.0
    %1261 = vmatprep.subr.mxu0 0.0
    %1262 = vmatpush1.xpose.msra.mxu0 0.0
    %1263 = vmatprep.subr.mxu0 0.0
    %1264 = vmatpush1.xpose.msra.mxu0 0.0
    %1265 = vmatprep.subr.mxu0 0.0
    %1266 = vmatpush1.xpose.msra.mxu0 0.0
    %1267 = vmatprep.subr.mxu0 0.0
    %1268 = vmatpush1.xpose.msra.mxu0 0.0
    %1269 = vmatprep.subr.mxu0 0.0
    %1270 = vmatpush1.xpose.msra.mxu0 0.0
    %1271 = vmatprep.subr.mxu0 0.0
    %1272 = vmatpush1.xpose.msra.mxu0 0.0
    %1273 = vmatprep.subr.mxu0 0.0
    %1274 = vmatpush1.xpose.msra.mxu0 0.0
    %1275 = vmatprep.subr.mxu0 0.0
    %1276 = vmatpush1.xpose.msra.mxu0 0.0
    %1277 = vmatprep.subr.mxu0 0.0
    %1278 = vmatpush1.xpose.msra.mxu0 0.0
    %1279 = vmatprep.subr.mxu0 0.0
    %1280 = vmatpush1.xpose.msra.mxu0 0.0
    %1281 = vmatprep.subr.mxu0 0.0
    %1282 = vmatpush1.xpose.msra.mxu0 0.0
    %1283 = vmatprep.subr.mxu0 0.0
    %1284 = vmatpush1.xpose.msra.mxu0 0.0
    %1285 = vmatprep.subr.mxu0 0.0
    %1286 = vmatpush1.xpose.msra.mxu0 0.0
    %1287 = vmatprep.subr.mxu0 0.0
    %1288 = vmatpush1.xpose.msra.mxu0 0.0
    %1289 = vmatprep.subr.mxu0 0.0
    %1290 = vmatpush1.xpose.msra.mxu0 0.0
    %1291 = vmatprep.subr.mxu0 0.0
    %1292 = vmatpush1.xpose.msra.mxu0 0.0
    %1293 = vmatprep.subr.mxu0 0.0
    %1294 = vmatpush1.xpose.msra.mxu0 0.0
    %1295 = vmatprep.subr.mxu0 0.0
    %1296 = vmatpush1.xpose.msra.mxu0 0.0
    %1297 = vmatprep.subr.mxu0 0.0
    %1298 = vmatpush1.xpose.msra.mxu0 0.0
    %1299 = vmatprep.subr.mxu0 0.0
    %1300 = vmatpush1.xpose.msra.mxu0 0.0
    %1301 = vmatprep.subr.mxu0 0.0
    %1302 = vmatpush1.xpose.msra.mxu0 0.0
    %1303 = vmatprep.subr.mxu0 0.0
    %1304 = vmatpush1.xpose.msra.mxu0 0.0
    %1305 = vmatprep.mubr.f32.mxu0 0.0
    %1306 = vmatmul.mubr.f32.gmra.mrb[0].mxu0 %v1233
    %v1307 = vpop.f32.mrb[0].mxu0
    %v1308 = vadd.f32 0.0, %v1307
    %v1309 = vpop.f32.mrb[0].mxu0
    %1310 = vmatprep.mubr.f32.mxu0 0.0
    %1311 = vmatmul.mubr.f32.gmra.mrb[0].mxu0 %v1235
    %v1312 = vpop.f32.mrb[0].mxu0
    %v1313 = vadd.f32 0.0, %v1312
    %v1314 = vpop.f32.mrb[0].mxu0
    %1315 = vdwg.mxu0
    %v1316 = vmul.f32 %v1308, 0.35355338
    %v1317 = vmul.f32 %v1313, 0.35355338
    %v1318 = vadd.f32 %v1316, %v1110
    %v1319 = vadd.f32 %v1317, %v1110
    %v1320 = vsel %vm256, %v1318, -inf
    %1321 = vmax.xlane.f32.xlu0 %v1320
    %v1322 = vpop.xlane.xlu0 %1321
    %v1323 = vsel %vm256, %v1319, -inf
    %1324 = vmax.xlane.f32.xlu0 %v1323
    %v1325 = vpop.xlane.xlu0 %1324
    %v1326 = vsub.f32 %v1318, %v1322
    %v1327 = vsub.f32 %v1319, %v1325
    %v1328 = vmul.f32 %v1326, 1.442695
    %v1329 = vpow.pop %v1328
    %v1330 = vmul.f32 %v1327, 1.442695
    %v1331 = vpow.pop %v1330
    %v1332 = vsel %vm256, %v1329, 0.0
    %1333 = vadd.xlane.f32.xlu0 %v1332
    %v1334 = vpop.xlane.xlu0 %1333
    %v1335 = vsel %vm256, %v1331, 0.0
    %1336 = vadd.xlane.f32.xlu0 %v1335
    %v1337 = vpop.xlane.xlu0 %1336
    %v1338 = vrcp.pop %v1334
    %v1339 = vrcp.pop %v1337
    %v1340 = vmul.f32 %v1329, %v1338
    %v1341 = vmul.f32 %v1331, %v1339
    %1342 = vrot.lane.b32.xlu0 %v144, 56
    %v1343 = vpop.permute.xlu0 %1342
    %1344 = vrot.lane.b32.xlu0 %v149, 56
    %v1345 = vpop.permute.xlu0 %1344
    %v1349 = vsel %vm256, %v1340, 0
    %v1352 = vsel %vm256, %v1341, 0
    %1354 = vmatprep.subr.mxu0 0.0
    %1355 = vmatpush1.msra.mxu0 %v1343
    %1356 = vmatprep.subr.mxu0 0.0
    %1357 = vmatpush1.msra.mxu0 %v1345
    %1358 = vmatprep.subr.mxu0 0.0
    %1359 = vmatpush1.msra.mxu0 0.0
    %1360 = vmatprep.subr.mxu0 0.0
    %1361 = vmatpush1.msra.mxu0 0.0
    %1362 = vmatprep.subr.mxu0 0.0
    %1363 = vmatpush1.msra.mxu0 0.0
    %1364 = vmatprep.subr.mxu0 0.0
    %1365 = vmatpush1.msra.mxu0 0.0
    %1366 = vmatprep.subr.mxu0 0.0
    %1367 = vmatpush1.msra.mxu0 0.0
    %1368 = vmatprep.subr.mxu0 0.0
    %1369 = vmatpush1.msra.mxu0 0.0
    %1370 = vmatprep.subr.mxu0 0.0
    %1371 = vmatpush1.msra.mxu0 0.0
    %1372 = vmatprep.subr.mxu0 0.0
    %1373 = vmatpush1.msra.mxu0 0.0
    %1374 = vmatprep.subr.mxu0 0.0
    %1375 = vmatpush1.msra.mxu0 0.0
    %1376 = vmatprep.subr.mxu0 0.0
    %1377 = vmatpush1.msra.mxu0 0.0
    %1378 = vmatprep.subr.mxu0 0.0
    %1379 = vmatpush1.msra.mxu0 0.0
    %1380 = vmatprep.subr.mxu0 0.0
    %1381 = vmatpush1.msra.mxu0 0.0
    %1382 = vmatprep.subr.mxu0 0.0
    %1383 = vmatpush1.msra.mxu0 0.0
    %1384 = vmatprep.subr.mxu0 0.0
    %1385 = vmatpush1.msra.mxu0 0.0
    %1386 = vmatprep.subr.mxu0 0.0
    %1387 = vmatpush1.msra.mxu0 0.0
    %1388 = vmatprep.subr.mxu0 0.0
    %1389 = vmatpush1.msra.mxu0 0.0
    %1390 = vmatprep.subr.mxu0 0.0
    %1391 = vmatpush1.msra.mxu0 0.0
    %1392 = vmatprep.subr.mxu0 0.0
    %1393 = vmatpush1.msra.mxu0 0.0
    %1394 = vmatprep.subr.mxu0 0.0
    %1395 = vmatpush1.msra.mxu0 0.0
    %1396 = vmatprep.subr.mxu0 0.0
    %1397 = vmatpush1.msra.mxu0 0.0
    %1398 = vmatprep.subr.mxu0 0.0
    %1399 = vmatpush1.msra.mxu0 0.0
    %1400 = vmatprep.subr.mxu0 0.0
    %1401 = vmatpush1.msra.mxu0 0.0
    %1402 = vmatprep.subr.mxu0 0.0
    %1403 = vmatpush1.msra.mxu0 0.0
    %1404 = vmatprep.subr.mxu0 0.0
    %1405 = vmatpush1.msra.mxu0 0.0
    %1406 = vmatprep.subr.mxu0 0.0
    %1407 = vmatpush1.msra.mxu0 0.0
    %1408 = vmatprep.subr.mxu0 0.0
    %1409 = vmatpush1.msra.mxu0 0.0
    %1410 = vmatprep.subr.mxu0 0.0
    %1411 = vmatpush1.msra.mxu0 0.0
    %1412 = vmatprep.subr.mxu0 0.0
    %1413 = vmatpush1.msra.mxu0 0.0
    %1414 = vmatprep.subr.mxu0 0.0
    %1415 = vmatpush1.msra.mxu0 0.0
    %1416 = vmatprep.subr.mxu0 0.0
    %1417 = vmatpush1.msra.mxu0 0.0
    %1418 = vmatprep.mubr.f32.mxu0 0.0
    %1419 = vmatmul.mubr.f32.gmra.mrb[0].mxu0 %v1349
    %v1420 = vpop.f32.mrb[0].mxu0
    %v1421 = vadd.f32 0.0, %v1420
    %v1422 = vpop.f32.mrb[0].mxu0
    %1423 = vmatprep.mubr.f32.mxu0 0.0
    %1424 = vmatmul.mubr.f32.gmra.mrb[0].mxu0 %v1352
    %v1425 = vpop.f32.mrb[0].mxu0
    %v1426 = vadd.f32 0.0, %v1425
    %v1427 = vpop.f32.mrb[0].mxu0
    %1428 = vdwg.mxu0
    %1431 = vrot.lane.b32.xlu0 %v1421, 8
    %v1432 = vpop.permute.xlu0 %1431
    %1433 = vrot.lane.b32.xlu0 %v1426, 8
    %v1434 = vpop.permute.xlu0 %1433
    %1437 = vst.msk [vmem:[#allocation2 + $0x10] sm:$0xff] %vm580, %v1432
    %1438 = vst.msk [vmem:[#allocation2 + $0x18] sm:$0xff] %vm580, %v1434
    %1439 = vrot.lane.b32.xlu0 %v144, 112
    %v1440 = vpop.permute.xlu0 %1439
    %1441 = vrot.lane.b32.xlu0 %v149, 112
    %v1442 = vpop.permute.xlu0 %1441
    %1443 = vrot.lane.b32.xlu0 %v144, 80
    %v1444 = vpop.permute.xlu0 %1443
    %1445 = vrot.lane.b32.xlu0 %v149, 80
    %v1446 = vpop.permute.xlu0 %1445
    %v1447 = vsel %vm162, %v1440, 0
    %v1449 = vsel %vm162, %v1442, 0
    %v1451 = vsel %vm162, %v1444, 0
    %v1453 = vsel %vm162, %v1446, 0
    %1455 = vmatprep.subr.mxu0 0.0
    %1456 = vmatpush1.xpose.msra.mxu0 %v1451
    %1457 = vmatprep.subr.mxu0 0.0
    %1458 = vmatpush1.xpose.msra.mxu0 %v1453
    %1459 = vmatprep.subr.mxu0 0.0
    %1460 = vmatpush1.xpose.msra.mxu0 0.0
    %1461 = vmatprep.subr.mxu0 0.0
    %1462 = vmatpush1.xpose.msra.mxu0 0.0
    %1463 = vmatprep.subr.mxu0 0.0
    %1464 = vmatpush1.xpose.msra.mxu0 0.0
    %1465 = vmatprep.subr.mxu0 0.0
    %1466 = vmatpush1.xpose.msra.mxu0 0.0
    %1467 = vmatprep.subr.mxu0 0.0
    %1468 = vmatpush1.xpose.msra.mxu0 0.0
    %1469 = vmatprep.subr.mxu0 0.0
    %1470 = vmatpush1.xpose.msra.mxu0 0.0
    %1471 = vmatprep.subr.mxu0 0.0
    %1472 = vmatpush1.xpose.msra.mxu0 0.0
    %1473 = vmatprep.subr.mxu0 0.0
    %1474 = vmatpush1.xpose.msra.mxu0 0.0
    %1475 = vmatprep.subr.mxu0 0.0
    %1476 = vmatpush1.xpose.msra.mxu0 0.0
    %1477 = vmatprep.subr.mxu0 0.0
    %1478 = vmatpush1.xpose.msra.mxu0 0.0
    %1479 = vmatprep.subr.mxu0 0.0
    %1480 = vmatpush1.xpose.msra.mxu0 0.0
    %1481 = vmatprep.subr.mxu0 0.0
    %1482 = vmatpush1.xpose.msra.mxu0 0.0
    %1483 = vmatprep.subr.mxu0 0.0
    %1484 = vmatpush1.xpose.msra.mxu0 0.0
    %1485 = vmatprep.subr.mxu0 0.0
    %1486 = vmatpush1.xpose.msra.mxu0 0.0
    %1487 = vmatprep.subr.mxu0 0.0
    %1488 = vmatpush1.xpose.msra.mxu0 0.0
    %1489 = vmatprep.subr.mxu0 0.0
    %1490 = vmatpush1.xpose.msra.mxu0 0.0
    %1491 = vmatprep.subr.mxu0 0.0
    %1492 = vmatpush1.xpose.msra.mxu0 0.0
    %1493 = vmatprep.subr.mxu0 0.0
    %1494 = vmatpush1.xpose.msra.mxu0 0.0
    %1495 = vmatprep.subr.mxu0 0.0
    %1496 = vmatpush1.xpose.msra.mxu0 0.0
    %1497 = vmatprep.subr.mxu0 0.0
    %1498 = vmatpush1.xpose.msra.mxu0 0.0
    %1499 = vmatprep.subr.mxu0 0.0
    %1500 = vmatpush1.xpose.msra.mxu0 0.0
    %1501 = vmatprep.subr.mxu0 0.0
    %1502 = vmatpush1.xpose.msra.mxu0 0.0
    %1503 = vmatprep.subr.mxu0 0.0
    %1504 = vmatpush1.xpose.msra.mxu0 0.0
    %1505 = vmatprep.subr.mxu0 0.0
    %1506 = vmatpush1.xpose.msra.mxu0 0.0
    %1507 = vmatprep.subr.mxu0 0.0
    %1508 = vmatpush1.xpose.msra.mxu0 0.0
    %1509 = vmatprep.subr.mxu0 0.0
    %1510 = vmatpush1.xpose.msra.mxu0 0.0
    %1511 = vmatprep.subr.mxu0 0.0
    %1512 = vmatpush1.xpose.msra.mxu0 0.0
    %1513 = vmatprep.subr.mxu0 0.0
    %1514 = vmatpush1.xpose.msra.mxu0 0.0
    %1515 = vmatprep.subr.mxu0 0.0
    %1516 = vmatpush1.xpose.msra.mxu0 0.0
    %1517 = vmatprep.subr.mxu0 0.0
    %1518 = vmatpush1.xpose.msra.mxu0 0.0
    %1519 = vmatprep.mubr.f32.mxu0 0.0
    %1520 = vmatmul.mubr.f32.gmra.mrb[0].mxu0 %v1447
    %v1521 = vpop.f32.mrb[0].mxu0
    %v1522 = vadd.f32 0.0, %v1521
    %v1523 = vpop.f32.mrb[0].mxu0
    %1524 = vmatprep.mubr.f32.mxu0 0.0
    %1525 = vmatmul.mubr.f32.gmra.mrb[0].mxu0 %v1449
    %v1526 = vpop.f32.mrb[0].mxu0
    %v1527 = vadd.f32 0.0, %v1526
    %v1528 = vpop.f32.mrb[0].mxu0
    %1529 = vdwg.mxu0
    %v1530 = vmul.f32 %v1522, 0.35355338
    %v1531 = vmul.f32 %v1527, 0.35355338
    %v1532 = vadd.f32 %v1530, %v1110
    %v1533 = vadd.f32 %v1531, %v1110
    %v1534 = vsel %vm256, %v1532, -inf
    %1535 = vmax.xlane.f32.xlu0 %v1534
    %v1536 = vpop.xlane.xlu0 %1535
    %v1537 = vsel %vm256, %v1533, -inf
    %1538 = vmax.xlane.f32.xlu0 %v1537
    %v1539 = vpop.xlane.xlu0 %1538
    %v1540 = vsub.f32 %v1532, %v1536
    %v1541 = vsub.f32 %v1533, %v1539
    %v1542 = vmul.f32 %v1540, 1.442695
    %v1543 = vpow.pop %v1542
    %v1544 = vmul.f32 %v1541, 1.442695
    %v1545 = vpow.pop %v1544
    %v1546 = vsel %vm256, %v1543, 0.0
    %1547 = vadd.xlane.f32.xlu0 %v1546
    %v1548 = vpop.xlane.xlu0 %1547
    %v1549 = vsel %vm256, %v1545, 0.0
    %1550 = vadd.xlane.f32.xlu0 %v1549
    %v1551 = vpop.xlane.xlu0 %1550
    %v1552 = vrcp.pop %v1548
    %v1553 = vrcp.pop %v1551
    %v1554 = vmul.f32 %v1543, %v1552
    %v1555 = vmul.f32 %v1545, %v1553
    %1556 = vrot.lane.b32.xlu0 %v144, 48
    %v1557 = vpop.permute.xlu0 %1556
    %1558 = vrot.lane.b32.xlu0 %v149, 48
    %v1559 = vpop.permute.xlu0 %1558
    %v1563 = vsel %vm256, %v1554, 0
    %v1566 = vsel %vm256, %v1555, 0
    %1568 = vmatprep.subr.mxu0 0.0
    %1569 = vmatpush1.msra.mxu0 %v1557
    %1570 = vmatprep.subr.mxu0 0.0
    %1571 = vmatpush1.msra.mxu0 %v1559
    %1572 = vmatprep.subr.mxu0 0.0
    %1573 = vmatpush1.msra.mxu0 0.0
    %1574 = vmatprep.subr.mxu0 0.0
    %1575 = vmatpush1.msra.mxu0 0.0
    %1576 = vmatprep.subr.mxu0 0.0
    %1577 = vmatpush1.msra.mxu0 0.0
    %1578 = vmatprep.subr.mxu0 0.0
    %1579 = vmatpush1.msra.mxu0 0.0
    %1580 = vmatprep.subr.mxu0 0.0
    %1581 = vmatpush1.msra.mxu0 0.0
    %1582 = vmatprep.subr.mxu0 0.0
    %1583 = vmatpush1.msra.mxu0 0.0
    %1584 = vmatprep.subr.mxu0 0.0
    %1585 = vmatpush1.msra.mxu0 0.0
    %1586 = vmatprep.subr.mxu0 0.0
    %1587 = vmatpush1.msra.mxu0 0.0
    %1588 = vmatprep.subr.mxu0 0.0
    %1589 = vmatpush1.msra.mxu0 0.0
    %1590 = vmatprep.subr.mxu0 0.0
    %1591 = vmatpush1.msra.mxu0 0.0
    %1592 = vmatprep.subr.mxu0 0.0
    %1593 = vmatpush1.msra.mxu0 0.0
    %1594 = vmatprep.subr.mxu0 0.0
    %1595 = vmatpush1.msra.mxu0 0.0
    %1596 = vmatprep.subr.mxu0 0.0
    %1597 = vmatpush1.msra.mxu0 0.0
    %1598 = vmatprep.subr.mxu0 0.0
    %1599 = vmatpush1.msra.mxu0 0.0
    %1600 = vmatprep.subr.mxu0 0.0
    %1601 = vmatpush1.msra.mxu0 0.0
    %1602 = vmatprep.subr.mxu0 0.0
    %1603 = vmatpush1.msra.mxu0 0.0
    %1604 = vmatprep.subr.mxu0 0.0
    %1605 = vmatpush1.msra.mxu0 0.0
    %1606 = vmatprep.subr.mxu0 0.0
    %1607 = vmatpush1.msra.mxu0 0.0
    %1608 = vmatprep.subr.mxu0 0.0
    %1609 = vmatpush1.msra.mxu0 0.0
    %1610 = vmatprep.subr.mxu0 0.0
    %1611 = vmatpush1.msra.mxu0 0.0
    %1612 = vmatprep.subr.mxu0 0.0
    %1613 = vmatpush1.msra.mxu0 0.0
    %1614 = vmatprep.subr.mxu0 0.0
    %1615 = vmatpush1.msra.mxu0 0.0
    %1616 = vmatprep.subr.mxu0 0.0
    %1617 = vmatpush1.msra.mxu0 0.0
    %1618 = vmatprep.subr.mxu0 0.0
    %1619 = vmatpush1.msra.mxu0 0.0
    %1620 = vmatprep.subr.mxu0 0.0
    %1621 = vmatpush1.msra.mxu0 0.0
    %1622 = vmatprep.subr.mxu0 0.0
    %1623 = vmatpush1.msra.mxu0 0.0
    %1624 = vmatprep.subr.mxu0 0.0
    %1625 = vmatpush1.msra.mxu0 0.0
    %1626 = vmatprep.subr.mxu0 0.0
    %1627 = vmatpush1.msra.mxu0 0.0
    %1628 = vmatprep.subr.mxu0 0.0
    %1629 = vmatpush1.msra.mxu0 0.0
    %1630 = vmatprep.subr.mxu0 0.0
    %1631 = vmatpush1.msra.mxu0 0.0
    %1632 = vmatprep.mubr.f32.mxu0 0.0
    %1633 = vmatmul.mubr.f32.gmra.mrb[0].mxu0 %v1563
    %v1634 = vpop.f32.mrb[0].mxu0
    %v1635 = vadd.f32 0.0, %v1634
    %v1636 = vpop.f32.mrb[0].mxu0
    %1637 = vmatprep.mubr.f32.mxu0 0.0
    %1638 = vmatmul.mubr.f32.gmra.mrb[0].mxu0 %v1566
    %v1639 = vpop.f32.mrb[0].mxu0
    %v1640 = vadd.f32 0.0, %v1639
    %v1641 = vpop.f32.mrb[0].mxu0
    %1642 = vdwg.mxu0
    %1645 = vrot.lane.b32.xlu0 %v1635, 16
    %v1646 = vpop.permute.xlu0 %1645
    %1647 = vrot.lane.b32.xlu0 %v1640, 16
    %v1648 = vpop.permute.xlu0 %1647
    %1651 = vst.msk [vmem:[#allocation2 + $0x10] sm:$0xff] %vm795, %v1646
    %1652 = vst.msk [vmem:[#allocation2 + $0x18] sm:$0xff] %vm795, %v1648
    %1653 = vrot.lane.b32.xlu0 %v144, 104
    %v1654 = vpop.permute.xlu0 %1653
    %1655 = vrot.lane.b32.xlu0 %v149, 104
    %v1656 = vpop.permute.xlu0 %1655
    %1657 = vrot.lane.b32.xlu0 %v144, 72
    %v1658 = vpop.permute.xlu0 %1657
    %1659 = vrot.lane.b32.xlu0 %v149, 72
    %v1660 = vpop.permute.xlu0 %1659
    %v1661 = vsel %vm162, %v1654, 0
    %v1663 = vsel %vm162, %v1656, 0
    %v1665 = vsel %vm162, %v1658, 0
    %v1667 = vsel %vm162, %v1660, 0
    %1669 = vmatprep.subr.mxu0 0.0
    %1670 = vmatpush1.xpose.msra.mxu0 %v1665
    %1671 = vmatprep.subr.mxu0 0.0
    %1672 = vmatpush1.xpose.msra.mxu0 %v1667
    %1673 = vmatprep.subr.mxu0 0.0
    %1674 = vmatpush1.xpose.msra.mxu0 0.0
    %1675 = vmatprep.subr.mxu0 0.0
    %1676 = vmatpush1.xpose.msra.mxu0 0.0
    %1677 = vmatprep.subr.mxu0 0.0
    %1678 = vmatpush1.xpose.msra.mxu0 0.0
    %1679 = vmatprep.subr.mxu0 0.0
    %1680 = vmatpush1.xpose.msra.mxu0 0.0
    %1681 = vmatprep.subr.mxu0 0.0
    %1682 = vmatpush1.xpose.msra.mxu0 0.0
    %1683 = vmatprep.subr.mxu0 0.0
    %1684 = vmatpush1.xpose.msra.mxu0 0.0
    %1685 = vmatprep.subr.mxu0 0.0
    %1686 = vmatpush1.xpose.msra.mxu0 0.0
    %1687 = vmatprep.subr.mxu0 0.0
    %1688 = vmatpush1.xpose.msra.mxu0 0.0
    %1689 = vmatprep.subr.mxu0 0.0
    %1690 = vmatpush1.xpose.msra.mxu0 0.0
    %1691 = vmatprep.subr.mxu0 0.0
    %1692 = vmatpush1.xpose.msra.mxu0 0.0
    %1693 = vmatprep.subr.mxu0 0.0
    %1694 = vmatpush1.xpose.msra.mxu0 0.0
    %1695 = vmatprep.subr.mxu0 0.0
    %1696 = vmatpush1.xpose.msra.mxu0 0.0
    %1697 = vmatprep.subr.mxu0 0.0
    %1698 = vmatpush1.xpose.msra.mxu0 0.0
    %1699 = vmatprep.subr.mxu0 0.0
    %1700 = vmatpush1.xpose.msra.mxu0 0.0
    %1701 = vmatprep.subr.mxu0 0.0
    %1702 = vmatpush1.xpose.msra.mxu0 0.0
    %1703 = vmatprep.subr.mxu0 0.0
    %1704 = vmatpush1.xpose.msra.mxu0 0.0
    %1705 = vmatprep.subr.mxu0 0.0
    %1706 = vmatpush1.xpose.msra.mxu0 0.0
    %1707 = vmatprep.subr.mxu0 0.0
    %1708 = vmatpush1.xpose.msra.mxu0 0.0
    %1709 = vmatprep.subr.mxu0 0.0
    %1710 = vmatpush1.xpose.msra.mxu0 0.0
    %1711 = vmatprep.subr.mxu0 0.0
    %1712 = vmatpush1.xpose.msra.mxu0 0.0
    %1713 = vmatprep.subr.mxu0 0.0
    %1714 = vmatpush1.xpose.msra.mxu0 0.0
    %1715 = vmatprep.subr.mxu0 0.0
    %1716 = vmatpush1.xpose.msra.mxu0 0.0
    %1717 = vmatprep.subr.mxu0 0.0
    %1718 = vmatpush1.xpose.msra.mxu0 0.0
    %1719 = vmatprep.subr.mxu0 0.0
    %1720 = vmatpush1.xpose.msra.mxu0 0.0
    %1721 = vmatprep.subr.mxu0 0.0
    %1722 = vmatpush1.xpose.msra.mxu0 0.0
    %1723 = vmatprep.subr.mxu0 0.0
    %1724 = vmatpush1.xpose.msra.mxu0 0.0
    %1725 = vmatprep.subr.mxu0 0.0
    %1726 = vmatpush1.xpose.msra.mxu0 0.0
    %1727 = vmatprep.subr.mxu0 0.0
    %1728 = vmatpush1.xpose.msra.mxu0 0.0
    %1729 = vmatprep.subr.mxu0 0.0
    %1730 = vmatpush1.xpose.msra.mxu0 0.0
    %1731 = vmatprep.subr.mxu0 0.0
    %1732 = vmatpush1.xpose.msra.mxu0 0.0
    %1733 = vmatprep.mubr.f32.mxu0 0.0
    %1734 = vmatmul.mubr.f32.gmra.mrb[0].mxu0 %v1661
    %v1735 = vpop.f32.mrb[0].mxu0
    %v1736 = vadd.f32 0.0, %v1735
    %v1737 = vpop.f32.mrb[0].mxu0
    %1738 = vmatprep.mubr.f32.mxu0 0.0
    %1739 = vmatmul.mubr.f32.gmra.mrb[0].mxu0 %v1663
    %v1740 = vpop.f32.mrb[0].mxu0
    %v1741 = vadd.f32 0.0, %v1740
    %v1742 = vpop.f32.mrb[0].mxu0
    %1743 = vdwg.mxu0
    %v1744 = vmul.f32 %v1736, 0.35355338
    %v1745 = vmul.f32 %v1741, 0.35355338
    %v1746 = vadd.f32 %v1744, %v1110
    %v1747 = vadd.f32 %v1745, %v1110
    %v1748 = vsel %vm256, %v1746, -inf
    %1749 = vmax.xlane.f32.xlu0 %v1748
    %v1750 = vpop.xlane.xlu0 %1749
    %v1751 = vsel %vm256, %v1747, -inf
    %1752 = vmax.xlane.f32.xlu0 %v1751
    %v1753 = vpop.xlane.xlu0 %1752
    %v1754 = vsub.f32 %v1746, %v1750
    %v1755 = vsub.f32 %v1747, %v1753
    %v1756 = vmul.f32 %v1754, 1.442695
    %v1757 = vpow.pop %v1756
    %v1758 = vmul.f32 %v1755, 1.442695
    %v1759 = vpow.pop %v1758
    %v1760 = vsel %vm256, %v1757, 0.0
    %1761 = vadd.xlane.f32.xlu0 %v1760
    %v1762 = vpop.xlane.xlu0 %1761
    %v1763 = vsel %vm256, %v1759, 0.0
    %1764 = vadd.xlane.f32.xlu0 %v1763
    %v1765 = vpop.xlane.xlu0 %1764
    %v1766 = vrcp.pop %v1762
    %v1767 = vrcp.pop %v1765
    %v1768 = vmul.f32 %v1757, %v1766
    %v1769 = vmul.f32 %v1759, %v1767
    %1770 = vrot.lane.b32.xlu0 %v144, 40
    %v1771 = vpop.permute.xlu0 %1770
    %1772 = vrot.lane.b32.xlu0 %v149, 40
    %v1773 = vpop.permute.xlu0 %1772
    %v1777 = vsel %vm256, %v1768, 0
    %v1780 = vsel %vm256, %v1769, 0
    %1782 = vmatprep.subr.mxu0 0.0
    %1783 = vmatpush1.msra.mxu0 %v1771
    %1784 = vmatprep.subr.mxu0 0.0
    %1785 = vmatpush1.msra.mxu0 %v1773
    %1786 = vmatprep.subr.mxu0 0.0
    %1787 = vmatpush1.msra.mxu0 0.0
    %1788 = vmatprep.subr.mxu0 0.0
    %1789 = vmatpush1.msra.mxu0 0.0
    %1790 = vmatprep.subr.mxu0 0.0
    %1791 = vmatpush1.msra.mxu0 0.0
    %1792 = vmatprep.subr.mxu0 0.0
    %1793 = vmatpush1.msra.mxu0 0.0
    %1794 = vmatprep.subr.mxu0 0.0
    %1795 = vmatpush1.msra.mxu0 0.0
    %1796 = vmatprep.subr.mxu0 0.0
    %1797 = vmatpush1.msra.mxu0 0.0
    %1798 = vmatprep.subr.mxu0 0.0
    %1799 = vmatpush1.msra.mxu0 0.0
    %1800 = vmatprep.subr.mxu0 0.0
    %1801 = vmatpush1.msra.mxu0 0.0
    %1802 = vmatprep.subr.mxu0 0.0
    %1803 = vmatpush1.msra.mxu0 0.0
    %1804 = vmatprep.subr.mxu0 0.0
    %1805 = vmatpush1.msra.mxu0 0.0
    %1806 = vmatprep.subr.mxu0 0.0
    %1807 = vmatpush1.msra.mxu0 0.0
    %1808 = vmatprep.subr.mxu0 0.0
    %1809 = vmatpush1.msra.mxu0 0.0
    %1810 = vmatprep.subr.mxu0 0.0
    %1811 = vmatpush1.msra.mxu0 0.0
    %1812 = vmatprep.subr.mxu0 0.0
    %1813 = vmatpush1.msra.mxu0 0.0
    %1814 = vmatprep.subr.mxu0 0.0
    %1815 = vmatpush1.msra.mxu0 0.0
    %1816 = vmatprep.subr.mxu0 0.0
    %1817 = vmatpush1.msra.mxu0 0.0
    %1818 = vmatprep.subr.mxu0 0.0
    %1819 = vmatpush1.msra.mxu0 0.0
    %1820 = vmatprep.subr.mxu0 0.0
    %1821 = vmatpush1.msra.mxu0 0.0
    %1822 = vmatprep.subr.mxu0 0.0
    %1823 = vmatpush1.msra.mxu0 0.0
    %1824 = vmatprep.subr.mxu0 0.0
    %1825 = vmatpush1.msra.mxu0 0.0
    %1826 = vmatprep.subr.mxu0 0.0
    %1827 = vmatpush1.msra.mxu0 0.0
    %1828 = vmatprep.subr.mxu0 0.0
    %1829 = vmatpush1.msra.mxu0 0.0
    %1830 = vmatprep.subr.mxu0 0.0
    %1831 = vmatpush1.msra.mxu0 0.0
    %1832 = vmatprep.subr.mxu0 0.0
    %1833 = vmatpush1.msra.mxu0 0.0
    %1834 = vmatprep.subr.mxu0 0.0
    %1835 = vmatpush1.msra.mxu0 0.0
    %1836 = vmatprep.subr.mxu0 0.0
    %1837 = vmatpush1.msra.mxu0 0.0
    %1838 = vmatprep.subr.mxu0 0.0
    %1839 = vmatpush1.msra.mxu0 0.0
    %1840 = vmatprep.subr.mxu0 0.0
    %1841 = vmatpush1.msra.mxu0 0.0
    %1842 = vmatprep.subr.mxu0 0.0
    %1843 = vmatpush1.msra.mxu0 0.0
    %1844 = vmatprep.subr.mxu0 0.0
    %1845 = vmatpush1.msra.mxu0 0.0
    %1846 = vmatprep.mubr.f32.mxu0 0.0
    %1847 = vmatmul.mubr.f32.gmra.mrb[0].mxu0 %v1777
    %v1848 = vpop.f32.mrb[0].mxu0
    %v1849 = vadd.f32 0.0, %v1848
    %v1850 = vpop.f32.mrb[0].mxu0
    %1851 = vmatprep.mubr.f32.mxu0 0.0
    %1852 = vmatmul.mubr.f32.gmra.mrb[0].mxu0 %v1780
    %v1853 = vpop.f32.mrb[0].mxu0
    %v1854 = vadd.f32 0.0, %v1853
    %v1855 = vpop.f32.mrb[0].mxu0
    %1856 = vdwg.mxu0
    %1859 = vrot.lane.b32.xlu0 %v1849, 24
    %v1860 = vpop.permute.xlu0 %1859
    %1861 = vrot.lane.b32.xlu0 %v1854, 24
    %v1862 = vpop.permute.xlu0 %1861
    %1865 = vst.msk [vmem:[#allocation2 + $0x10] sm:$0xff] %vm1010, %v1860
    %1866 = vst.msk [vmem:[#allocation2 + $0x18] sm:$0xff] %vm1010, %v1862
    %v1867 = vld [vmem:[#allocation2] sm:$0xff]
    %v1868 = vld [vmem:[#allocation2 + $0x8] sm:$0xff]
    %v1869 = vld [vmem:[#allocation2 + $0x10] sm:$0xff]
    %v1870 = vld [vmem:[#allocation2 + $0x18] sm:$0xff]
    %v1871 = vld [vmem:[%s3] sm:$0xff]
    %v1872 = vld [vmem:[%s3 + $0x8] sm:$0xff]
    %v1873 = vld [vmem:[%s3 + $0x10] sm:$0xff]
    %v1874 = vld [vmem:[%s3 + $0x18] sm:$0xff]
    %v1875 = vlaneseq
    %v1876 = vshrl.u32 %v1875, 7
    %v1877 = vsub.s32 1, %v1876
    %v1878 = vrot.slane %v45, %v1877
    %v1880 = vsel %vm54, %v1867, 0
    %v1883 = vsel %vm54, %v1868, 0
    %v1886 = vsel %vm54, %v1869, 0
    %v1889 = vsel %vm54, %v1870, 0
    %1891 = vmatprep.subr.mxu0 0.0
    %1892 = vmatpush1.msra.mxu0 %v1871
    %1893 = vmatprep.subr.mxu0 0.0
    %1894 = vmatpush1.msra.mxu0 %v1872
    %1895 = vmatprep.subr.mxu0 0.0
    %1896 = vmatpush1.msra.mxu0 %v1873
    %1897 = vmatprep.subr.mxu0 0.0
    %1898 = vmatpush1.msra.mxu0 %v1874
    %1899 = vmatprep.subr.mxu0 0.0
    %1900 = vmatpush1.msra.mxu0 0.0
    %1901 = vmatprep.subr.mxu0 0.0
    %1902 = vmatpush1.msra.mxu0 0.0
    %1903 = vmatprep.subr.mxu0 0.0
    %1904 = vmatpush1.msra.mxu0 0.0
    %1905 = vmatprep.subr.mxu0 0.0
    %1906 = vmatpush1.msra.mxu0 0.0
    %1907 = vmatprep.subr.mxu0 0.0
    %1908 = vmatpush1.msra.mxu0 0.0
    %1909 = vmatprep.subr.mxu0 0.0
    %1910 = vmatpush1.msra.mxu0 0.0
    %1911 = vmatprep.subr.mxu0 0.0
    %1912 = vmatpush1.msra.mxu0 0.0
    %1913 = vmatprep.subr.mxu0 0.0
    %1914 = vmatpush1.msra.mxu0 0.0
    %1915 = vmatprep.subr.mxu0 0.0
    %1916 = vmatpush1.msra.mxu0 0.0
    %1917 = vmatprep.subr.mxu0 0.0
    %1918 = vmatpush1.msra.mxu0 0.0
    %1919 = vmatprep.subr.mxu0 0.0
    %1920 = vmatpush1.msra.mxu0 0.0
    %1921 = vmatprep.subr.mxu0 0.0
    %1922 = vmatpush1.msra.mxu0 0.0
    %1923 = vmatprep.subr.mxu0 0.0
    %1924 = vmatpush1.msra.mxu0 0.0
    %1925 = vmatprep.subr.mxu0 0.0
    %1926 = vmatpush1.msra.mxu0 0.0
    %1927 = vmatprep.subr.mxu0 0.0
    %1928 = vmatpush1.msra.mxu0 0.0
    %1929 = vmatprep.subr.mxu0 0.0
    %1930 = vmatpush1.msra.mxu0 0.0
    %1931 = vmatprep.subr.mxu0 0.0
    %1932 = vmatpush1.msra.mxu0 0.0
    %1933 = vmatprep.subr.mxu0 0.0
    %1934 = vmatpush1.msra.mxu0 0.0
    %1935 = vmatprep.subr.mxu0 0.0
    %1936 = vmatpush1.msra.mxu0 0.0
    %1937 = vmatprep.subr.mxu0 0.0
    %1938 = vmatpush1.msra.mxu0 0.0
    %1939 = vmatprep.subr.mxu0 0.0
    %1940 = vmatpush1.msra.mxu0 0.0
    %1941 = vmatprep.subr.mxu0 0.0
    %1942 = vmatpush1.msra.mxu0 0.0
    %1943 = vmatprep.subr.mxu0 0.0
    %1944 = vmatpush1.msra.mxu0 0.0
    %1945 = vmatprep.subr.mxu0 0.0
    %1946 = vmatpush1.msra.mxu0 0.0
    %1947 = vmatprep.subr.mxu0 0.0
    %1948 = vmatpush1.msra.mxu0 0.0
    %1949 = vmatprep.subr.mxu0 0.0
    %1950 = vmatpush1.msra.mxu0 0.0
    %1951 = vmatprep.subr.mxu0 0.0
    %1952 = vmatpush1.msra.mxu0 0.0
    %1953 = vmatprep.subr.mxu0 0.0
    %1954 = vmatpush1.msra.mxu0 0.0
    %1955 = vmatprep.mubr.f32.mxu0 0.0
    %1956 = vmatmul.mubr.f32.gmra.mrb[0].mxu0 %v1880
    %v1957 = vpop.f32.mrb[0].mxu0
    %v1958 = vadd.f32 %v1878, %v1957
    %v1959 = vpop.f32.mrb[0].mxu0
    %1960 = vmatprep.mubr.f32.mxu0 0.0
    %1961 = vmatmul.mubr.f32.gmra.mrb[0].mxu0 %v1883
    %v1962 = vpop.f32.mrb[0].mxu0
    %v1963 = vadd.f32 %v1878, %v1962
    %v1964 = vpop.f32.mrb[0].mxu0
    %1965 = vmatprep.mubr.f32.mxu0 0.0
    %1966 = vmatmul.mubr.f32.gmra.mrb[0].mxu0 %v1886
    %v1967 = vpop.f32.mrb[0].mxu0
    %v1968 = vadd.f32 %v1878, %v1967
    %v1969 = vpop.f32.mrb[0].mxu0
    %1970 = vmatprep.mubr.f32.mxu0 0.0
    %1971 = vmatmul.mubr.f32.gmra.mrb[0].mxu0 %v1889
    %v1972 = vpop.f32.mrb[0].mxu0
    %v1973 = vadd.f32 %v1878, %v1972
    %v1974 = vpop.f32.mrb[0].mxu0
    %1975 = vdwg.mxu0
    %v1976 = vadd.f32 %v41, %v1958
    %v1977 = vadd.f32 %v42, %v1963
    %v1978 = vadd.f32 %v43, %v1968
    %v1979 = vadd.f32 %v44, %v1973
    %v1980 = vsel %vm54, %v1976, 0.0
    %1981 = vadd.xlane.f32.xlu0 %v1980
    %v1982 = vpop.xlane.xlu0 %1981
    %v1983 = vsel %vm54, %v1977, 0.0
    %1984 = vadd.xlane.f32.xlu0 %v1983
    %v1985 = vpop.xlane.xlu0 %1984
    %v1986 = vsel %vm54, %v1978, 0.0
    %1987 = vadd.xlane.f32.xlu0 %v1986
    %v1988 = vpop.xlane.xlu0 %1987
    %v1989 = vsel %vm54, %v1979, 0.0
    %1990 = vadd.xlane.f32.xlu0 %v1989
    %v1991 = vpop.xlane.xlu0 %1990
    %v1992 = vrcp.pop 32.0
    %v1993 = vmul.f32 %v1982, %v1992
    %v1994 = vmul.f32 %v1985, %v1992
    %v1995 = vmul.f32 %v1988, %v1992
    %v1996 = vmul.f32 %v1991, %v1992
    %v1997 = vsub.f32 %v1976, %v1993
    %v1998 = vsub.f32 %v1977, %v1994
    %v1999 = vsub.f32 %v1978, %v1995
    %v2000 = vsub.f32 %v1979, %v1996
    %v2001 = vmul.f32 %v1997, %v1997
    %v2002 = vmul.f32 %v1998, %v1998
    %v2003 = vmul.f32 %v1999, %v1999
    %v2004 = vmul.f32 %v2000, %v2000
    %v2005 = vsel %vm54, %v2001, 0.0
    %2006 = vadd.xlane.f32.xlu0 %v2005
    %v2007 = vpop.xlane.xlu0 %2006
    %v2008 = vsel %vm54, %v2002, 0.0
    %2009 = vadd.xlane.f32.xlu0 %v2008
    %v2010 = vpop.xlane.xlu0 %2009
    %v2011 = vsel %vm54, %v2003, 0.0
    %2012 = vadd.xlane.f32.xlu0 %v2011
    %v2013 = vpop.xlane.xlu0 %2012
    %v2014 = vsel %vm54, %v2004, 0.0
    %2015 = vadd.xlane.f32.xlu0 %v2014
    %v2016 = vpop.xlane.xlu0 %2015
    %v2017 = vmul.f32 %v2007, %v1992
    %v2018 = vmul.f32 %v2010, %v1992
    %v2019 = vmul.f32 %v2013, %v1992
    %v2020 = vmul.f32 %v2016, %v1992
    %v2021 = vadd.f32 %v2017, 1e-05
    %v2022 = vadd.f32 %v2018, 1e-05
    %v2023 = vadd.f32 %v2019, 1e-05
    %v2024 = vadd.f32 %v2020, 1e-05
    %v2025 = vrsqrt.pop %v2021
    %v2026 = vrsqrt.pop %v2022
    %v2027 = vrsqrt.pop %v2023
    %v2028 = vrsqrt.pop %v2024
    %v2029 = vmul.f32 %v1997, %v2025
    %v2030 = vmul.f32 %v1998, %v2026
    %v2031 = vmul.f32 %v1999, %v2027
    %v2032 = vmul.f32 %v2000, %v2028
    %v2033 = vlaneseq
    %v2034 = vshrl.u32 %v2033, 7
    %v2035 = vsub.s32 2, %v2034
    %v2036 = vrot.slane %v45, %v2035
    %v2037 = vmul.f32 %v2029, %v2036
    %v2038 = vmul.f32 %v2030, %v2036
    %v2039 = vmul.f32 %v2031, %v2036
    %v2040 = vmul.f32 %v2032, %v2036
    %v2041 = vlaneseq
    %v2042 = vshrl.u32 %v2041, 7
    %v2043 = vsub.s32 3, %v2042
    %v2044 = vrot.slane %v45, %v2043
    %v2045 = vadd.f32 %v2037, %v2044
    %v2046 = vadd.f32 %v2038, %v2044
    %v2047 = vadd.f32 %v2039, %v2044
    %v2048 = vadd.f32 %v2040, %v2044
    %v2049 = vld [vmem:[#allocation3] sm:$0xff]
    %v2050 = vld [vmem:[#allocation3 + $0x8] sm:$0xff]
    %v2051 = vld [vmem:[#allocation3 + $0x10] sm:$0xff]
    %v2052 = vld [vmem:[#allocation3 + $0x18] sm:$0xff]
    %v2053 = vlaneseq
    %v2054 = vshrl.u32 %v2053, 7
    %v2055 = vsub.s32 4, %v2054
    %v2056 = vrot.slane %v45, %v2055
    %v2058 = vsel %vm54, %v2045, 0
    %v2061 = vsel %vm54, %v2046, 0
    %v2064 = vsel %vm54, %v2047, 0
    %v2067 = vsel %vm54, %v2048, 0
    %2069 = vmatprep.subr.mxu0 0.0
    %2070 = vmatpush1.msra.mxu0 %v2049
    %2071 = vmatprep.subr.mxu0 0.0
    %2072 = vmatpush1.msra.mxu0 %v2050
    %2073 = vmatprep.subr.mxu0 0.0
    %2074 = vmatpush1.msra.mxu0 %v2051
    %2075 = vmatprep.subr.mxu0 0.0
    %2076 = vmatpush1.msra.mxu0 %v2052
    %2077 = vmatprep.subr.mxu0 0.0
    %2078 = vmatpush1.msra.mxu0 0.0
    %2079 = vmatprep.subr.mxu0 0.0
    %2080 = vmatpush1.msra.mxu0 0.0
    %2081 = vmatprep.subr.mxu0 0.0
    %2082 = vmatpush1.msra.mxu0 0.0
    %2083 = vmatprep.subr.mxu0 0.0
    %2084 = vmatpush1.msra.mxu0 0.0
    %2085 = vmatprep.subr.mxu0 0.0
    %2086 = vmatpush1.msra.mxu0 0.0
    %2087 = vmatprep.subr.mxu0 0.0
    %2088 = vmatpush1.msra.mxu0 0.0
    %2089 = vmatprep.subr.mxu0 0.0
    %2090 = vmatpush1.msra.mxu0 0.0
    %2091 = vmatprep.subr.mxu0 0.0
    %2092 = vmatpush1.msra.mxu0 0.0
    %2093 = vmatprep.subr.mxu0 0.0
    %2094 = vmatpush1.msra.mxu0 0.0
    %2095 = vmatprep.subr.mxu0 0.0
    %2096 = vmatpush1.msra.mxu0 0.0
    %2097 = vmatprep.subr.mxu0 0.0
    %2098 = vmatpush1.msra.mxu0 0.0
    %2099 = vmatprep.subr.mxu0 0.0
    %2100 = vmatpush1.msra.mxu0 0.0
    %2101 = vmatprep.subr.mxu0 0.0
    %2102 = vmatpush1.msra.mxu0 0.0
    %2103 = vmatprep.subr.mxu0 0.0
    %2104 = vmatpush1.msra.mxu0 0.0
    %2105 = vmatprep.subr.mxu0 0.0
    %2106 = vmatpush1.msra.mxu0 0.0
    %2107 = vmatprep.subr.mxu0 0.0
    %2108 = vmatpush1.msra.mxu0 0.0
    %2109 = vmatprep.subr.mxu0 0.0
    %2110 = vmatpush1.msra.mxu0 0.0
    %2111 = vmatprep.subr.mxu0 0.0
    %2112 = vmatpush1.msra.mxu0 0.0
    %2113 = vmatprep.subr.mxu0 0.0
    %2114 = vmatpush1.msra.mxu0 0.0
    %2115 = vmatprep.subr.mxu0 0.0
    %2116 = vmatpush1.msra.mxu0 0.0
    %2117 = vmatprep.subr.mxu0 0.0
    %2118 = vmatpush1.msra.mxu0 0.0
    %2119 = vmatprep.subr.mxu0 0.0
    %2120 = vmatpush1.msra.mxu0 0.0
    %2121 = vmatprep.subr.mxu0 0.0
    %2122 = vmatpush1.msra.mxu0 0.0
    %2123 = vmatprep.subr.mxu0 0.0
    %2124 = vmatpush1.msra.mxu0 0.0
    %2125 = vmatprep.subr.mxu0 0.0
    %2126 = vmatpush1.msra.mxu0 0.0
    %2127 = vmatprep.subr.mxu0 0.0
    %2128 = vmatpush1.msra.mxu0 0.0
    %2129 = vmatprep.subr.mxu0 0.0
    %2130 = vmatpush1.msra.mxu0 0.0
    %2131 = vmatprep.subr.mxu0 0.0
    %2132 = vmatpush1.msra.mxu0 0.0
    %2133 = vmatprep.mubr.f32.mxu0 0.0
    %2134 = vmatmul.mubr.f32.gmra.mrb[0].mxu0 %v2058
    %v2135 = vpop.f32.mrb[0].mxu0
    %v2136 = vadd.f32 %v2056, %v2135
    %v2137 = vpop.f32.mrb[0].mxu0
    %2138 = vmatprep.mubr.f32.mxu0 0.0
    %2139 = vmatmul.mubr.f32.gmra.mrb[0].mxu0 %v2061
    %v2140 = vpop.f32.mrb[0].mxu0
    %v2141 = vadd.f32 %v2056, %v2140
    %v2142 = vpop.f32.mrb[0].mxu0
    %2143 = vmatprep.mubr.f32.mxu0 0.0
    %2144 = vmatmul.mubr.f32.gmra.mrb[0].mxu0 %v2064
    %v2145 = vpop.f32.mrb[0].mxu0
    %v2146 = vadd.f32 %v2056, %v2145
    %v2147 = vpop.f32.mrb[0].mxu0
    %2148 = vmatprep.mubr.f32.mxu0 0.0
    %2149 = vmatmul.mubr.f32.gmra.mrb[0].mxu0 %v2067
    %v2150 = vpop.f32.mrb[0].mxu0
    %v2151 = vadd.f32 %v2056, %v2150
    %v2152 = vpop.f32.mrb[0].mxu0
    %2153 = vdwg.mxu0
    %v2154 = vmax.f32 %v2136, 0.0
    %v2155 = vmax.f32 %v2141, 0.0
    %v2156 = vmax.f32 %v2146, 0.0
    %v2157 = vmax.f32 %v2151, 0.0
    %v2158 = vld [vmem:[%s5] sm:$0xff]
    %v2159 = vld [vmem:[%s5 + $0x8] sm:$0xff]
    %v2160 = vld [vmem:[%s5 + $0x10] sm:$0xff]
    %v2161 = vld [vmem:[%s5 + $0x18] sm:$0xff]
    %v2162 = vld [vmem:[%s5 + $0x20] sm:$0xff]
    %v2163 = vld [vmem:[%s5 + $0x28] sm:$0xff]
    %v2164 = vld [vmem:[%s5 + $0x30] sm:$0xff]
    %v2165 = vld [vmem:[%s5 + $0x38] sm:$0xff]
    %v2166 = vlaneseq
    %v2167 = vshrl.u32 %v2166, 7
    %v2168 = vsub.s32 5, %v2167
    %v2169 = vrot.slane %v45, %v2168
    %vm2170 = vcmask 523264
    %v2172 = vsel %vm2170, %v2154, 0
    %v2175 = vsel %vm2170, %v2155, 0
    %v2178 = vsel %vm2170, %v2156, 0
    %v2181 = vsel %vm2170, %v2157, 0
    %2183 = vmatprep.subr.mxu0 0.0
    %2184 = vmatpush1.msra.mxu0 %v2158
    %2185 = vmatprep.subr.mxu0 0.0
    %2186 = vmatpush1.msra.mxu0 %v2159
    %2187 = vmatprep.subr.mxu0 0.0
    %2188 = vmatpush1.msra.mxu0 %v2160
    %2189 = vmatprep.subr.mxu0 0.0
    %2190 = vmatpush1.msra.mxu0 %v2161
    %2191 = vmatprep.subr.mxu0 0.0
    %2192 = vmatpush1.msra.mxu0 %v2162
    %2193 = vmatprep.subr.mxu0 0.0
    %2194 = vmatpush1.msra.mxu0 %v2163
    %2195 = vmatprep.subr.mxu0 0.0
    %2196 = vmatpush1.msra.mxu0 %v2164
    %2197 = vmatprep.subr.mxu0 0.0
    %2198 = vmatpush1.msra.mxu0 %v2165
    %2199 = vmatprep.subr.mxu0 0.0
    %2200 = vmatpush1.msra.mxu0 0.0
    %2201 = vmatprep.subr.mxu0 0.0
    %2202 = vmatpush1.msra.mxu0 0.0
    %2203 = vmatprep.subr.mxu0 0.0
    %2204 = vmatpush1.msra.mxu0 0.0
    %2205 = vmatprep.subr.mxu0 0.0
    %2206 = vmatpush1.msra.mxu0 0.0
    %2207 = vmatprep.subr.mxu0 0.0
    %2208 = vmatpush1.msra.mxu0 0.0
    %2209 = vmatprep.subr.mxu0 0.0
    %2210 = vmatpush1.msra.mxu0 0.0
    %2211 = vmatprep.subr.mxu0 0.0
    %2212 = vmatpush1.msra.mxu0 0.0
    %2213 = vmatprep.subr.mxu0 0.0
    %2214 = vmatpush1.msra.mxu0 0.0
    %2215 = vmatprep.subr.mxu0 0.0
    %2216 = vmatpush1.msra.mxu0 0.0
    %2217 = vmatprep.subr.mxu0 0.0
    %2218 = vmatpush1.msra.mxu0 0.0
    %2219 = vmatprep.subr.mxu0 0.0
    %2220 = vmatpush1.msra.mxu0 0.0
    %2221 = vmatprep.subr.mxu0 0.0
    %2222 = vmatpush1.msra.mxu0 0.0
    %2223 = vmatprep.subr.mxu0 0.0
    %2224 = vmatpush1.msra.mxu0 0.0
    %2225 = vmatprep.subr.mxu0 0.0
    %2226 = vmatpush1.msra.mxu0 0.0
    %2227 = vmatprep.subr.mxu0 0.0
    %2228 = vmatpush1.msra.mxu0 0.0
    %2229 = vmatprep.subr.mxu0 0.0
    %2230 = vmatpush1.msra.mxu0 0.0
    %2231 = vmatprep.subr.mxu0 0.0
    %2232 = vmatpush1.msra.mxu0 0.0
    %2233 = vmatprep.subr.mxu0 0.0
    %2234 = vmatpush1.msra.mxu0 0.0
    %2235 = vmatprep.subr.mxu0 0.0
    %2236 = vmatpush1.msra.mxu0 0.0
    %2237 = vmatprep.subr.mxu0 0.0
    %2238 = vmatpush1.msra.mxu0 0.0
    %2239 = vmatprep.subr.mxu0 0.0
    %2240 = vmatpush1.msra.mxu0 0.0
    %2241 = vmatprep.subr.mxu0 0.0
    %2242 = vmatpush1.msra.mxu0 0.0
    %2243 = vmatprep.subr.mxu0 0.0
    %2244 = vmatpush1.msra.mxu0 0.0
    %2245 = vmatprep.subr.mxu0 0.0
    %2246 = vmatpush1.msra.mxu0 0.0
    %2247 = vmatprep.mubr.f32.mxu0 0.0
    %2248 = vmatmul.mubr.f32.gmra.mrb[0].mxu0 %v2172
    %v2249 = vpop.f32.mrb[0].mxu0
    %v2250 = vadd.f32 %v2169, %v2249
    %v2251 = vpop.f32.mrb[0].mxu0
    %2252 = vmatprep.mubr.f32.mxu0 0.0
    %2253 = vmatmul.mubr.f32.gmra.mrb[0].mxu0 %v2175
    %v2254 = vpop.f32.mrb[0].mxu0
    %v2255 = vadd.f32 %v2169, %v2254
    %v2256 = vpop.f32.mrb[0].mxu0
    %2257 = vmatprep.mubr.f32.mxu0 0.0
    %2258 = vmatmul.mubr.f32.gmra.mrb[0].mxu0 %v2178
    %v2259 = vpop.f32.mrb[0].mxu0
    %v2260 = vadd.f32 %v2169, %v2259
    %v2261 = vpop.f32.mrb[0].mxu0
    %2262 = vmatprep.mubr.f32.mxu0 0.0
    %2263 = vmatmul.mubr.f32.gmra.mrb[0].mxu0 %v2181
    %v2264 = vpop.f32.mrb[0].mxu0
    %v2265 = vadd.f32 %v2169, %v2264
    %v2266 = vpop.f32.mrb[0].mxu0
    %2267 = vdwg.mxu0
    %v2268 = vadd.f32 %v2045, %v2250
    %v2269 = vadd.f32 %v2046, %v2255
    %v2270 = vadd.f32 %v2047, %v2260
    %v2271 = vadd.f32 %v2048, %v2265
    %v2272 = vsel %vm54, %v2268, 0.0
    %2273 = vadd.xlane.f32.xlu0 %v2272
    %v2274 = vpop.xlane.xlu0 %2273
    %v2275 = vsel %vm54, %v2269, 0.0
    %2276 = vadd.xlane.f32.xlu0 %v2275
    %v2277 = vpop.xlane.xlu0 %2276
    %v2278 = vsel %vm54, %v2270, 0.0
    %2279 = vadd.xlane.f32.xlu0 %v2278
    %v2280 = vpop.xlane.xlu0 %2279
    %v2281 = vsel %vm54, %v2271, 0.0
    %2282 = vadd.xlane.f32.xlu0 %v2281
    %v2283 = vpop.xlane.xlu0 %2282
    %v2284 = vmul.f32 %v2274, %v1992
    %v2285 = vmul.f32 %v2277, %v1992
    %v2286 = vmul.f32 %v2280, %v1992
    %v2287 = vmul.f32 %v2283, %v1992
    %v2288 = vsub.f32 %v2268, %v2284
    %v2289 = vsub.f32 %v2269, %v2285
    %v2290 = vsub.f32 %v2270, %v2286
    %v2291 = vsub.f32 %v2271, %v2287
    %v2292 = vmul.f32 %v2288, %v2288
    %v2293 = vmul.f32 %v2289, %v2289
    %v2294 = vmul.f32 %v2290, %v2290
    %v2295 = vmul.f32 %v2291, %v2291
    %v2296 = vsel %vm54, %v2292, 0.0
    %2297 = vadd.xlane.f32.xlu0 %v2296
    %v2298 = vpop.xlane.xlu0 %2297
    %v2299 = vsel %vm54, %v2293, 0.0
    %2300 = vadd.xlane.f32.xlu0 %v2299
    %v2301 = vpop.xlane.xlu0 %2300
    %v2302 = vsel %vm54, %v2294, 0.0
    %2303 = vadd.xlane.f32.xlu0 %v2302
    %v2304 = vpop.xlane.xlu0 %2303
    %v2305 = vsel %vm54, %v2295, 0.0
    %2306 = vadd.xlane.f32.xlu0 %v2305
    %v2307 = vpop.xlane.xlu0 %2306
    %v2308 = vmul.f32 %v2298, %v1992
    %v2309 = vmul.f32 %v2301, %v1992
    %v2310 = vmul.f32 %v2304, %v1992
    %v2311 = vmul.f32 %v2307, %v1992
    %v2312 = vadd.f32 %v2308, 1e-05
    %v2313 = vadd.f32 %v2309, 1e-05
    %v2314 = vadd.f32 %v2310, 1e-05
    %v2315 = vadd.f32 %v2311, 1e-05
    %v2316 = vrsqrt.pop %v2312
    %v2317 = vrsqrt.pop %v2313
    %v2318 = vrsqrt.pop %v2314
    %v2319 = vrsqrt.pop %v2315
    %v2320 = vmul.f32 %v2288, %v2316
    %v2321 = vmul.f32 %v2289, %v2317
    %v2322 = vmul.f32 %v2290, %v2318
    %v2323 = vmul.f32 %v2291, %v2319
    %v2324 = vlaneseq
    %v2325 = vshrl.u32 %v2324, 7
    %v2326 = vsub.s32 6, %v2325
    %v2327 = vrot.slane %v45, %v2326
    %v2328 = vmul.f32 %v2320, %v2327
    %v2329 = vmul.f32 %v2321, %v2327
    %v2330 = vmul.f32 %v2322, %v2327
    %v2331 = vmul.f32 %v2323, %v2327
    %v2332 = vlaneseq
    %v2333 = vshrl.u32 %v2332, 7
    %v2334 = vsub.s32 7, %v2333
    %v2335 = vrot.slane %v45, %v2334
    %v2336 = vadd.f32 %v2328, %v2335
    %v2337 = vadd.f32 %v2329, %v2335
    %v2338 = vadd.f32 %v2330, %v2335
    %v2339 = vadd.f32 %v2331, %v2335
    %2340 = vst.msk [vmem:[#allocation6] sm:$0xff] %vm54, %v2336
    %2341 = vst.msk [vmem:[#allocation6 + $0x8] sm:$0xff] %vm54, %v2337
    %2342 = vst.msk [vmem:[#allocation6 + $0x10] sm:$0xff] %vm54, %v2338
    %2343 = vst.msk [vmem:[#allocation6 + $0x18] sm:$0xff] %vm54, %v2339
    // Predicated region
    $region34: #{tpu_custom_call.1} parent=1 // pred_check
      _
    $region35: #{tpu_custom_call.1} parent=1 // pred_check_branch
      %2345 = sbr.rel (0) target = $region37
    $region36: #{tpu_custom_call.1} parent=1 // pred_region
      %s2347 = ssub.s32 512, 512
      %2348 = vsyncadd [#allocation5], %s2347
      %s2349 = sshll.u32 [#allocation6], 4
      %s2350 = int_to_ptr.vmem [resolvable:$true] %s2349
      %2355 = dma.vmem_to_hbm [thread:$0]  %s2350, 512, %s7, [#allocation5], 128, 128, 8
    $region37: #{tpu_custom_call.1} parent=1 // pred_fallthru
      _
    // Predicated region
    $region38: #{tpu_custom_call.1} parent=1 // pred_check
      _
    $region39: #{tpu_custom_call.1} parent=1 // pred_check_branch
      %2357 = sbr.rel (0) target = $region41
    $region40: #{tpu_custom_call.1} parent=1 // pred_region
      %2358 = dma.done [#allocation5], 512
    $region41: #{tpu_custom_call.1} parent=1 // pred_fallthru
      _
    %2359 = vsyncpa [#allocation4], 1
    %2360 = vsyncpa [#allocation5], 1

</llo_original>
